<compile_context>
chip_gen: v7x
topology: tpu7x:2x2x1
jax: 0.10.0
libtpu: 0.0.40
codegen_flags: <defaults>
</compile_context>

<pallas_src>
import functools
import math

import jax
import jax.numpy as jnp
from jax.experimental import pallas as pl
from jax.experimental.pallas import tpu as pltpu


# Conservative scoped-VMEM budget valid on v5e/v6e/v7x (v7x physical is only
# 64 MiB); tiles below are sized so double-buffering stays far under this.
_VMEM_LIMIT_BYTES = 32 * 1024 * 1024


def _round_up(v, m):
    return (v + m - 1) // m * m


def _tiles(dim, align, max_tile):
    """Return (tile, padded_dim): tile is a multiple of `align`, <= max_tile
    (unless the aligned dim itself is smaller), padded_dim a multiple of tile."""
    d = _round_up(dim, align)
    if d <= max_tile:
        return d, d
    t = (max_tile // align) * align
    return t, _round_up(d, t)


def _pad2(x, rows, cols):
    r, c = x.shape
    if r == rows and c == cols:
        return x
    return jnp.pad(x, ((0, rows - r), (0, cols - c)))


# ---------------------------------------------------------------------------
# Kernel 1: tiled matmul + bias (+ optional fused residual add)
#   grid = (M/tm, N/tn, K/tk), f32 accumulator scratch, bf16 in / bf16 out
# ---------------------------------------------------------------------------
def _linear_kernel(x_ref, w_ref, b_ref, *rest, has_res):
    if has_res:
        res_ref, o_ref, acc_ref = rest
    else:
        o_ref, acc_ref = rest
    k = pl.program_id(2)

    @pl.when(k == 0)
    def _():
        acc_ref[...] = jnp.zeros_like(acc_ref)

    acc_ref[...] += jnp.dot(x_ref[...], w_ref[...],
                            preferred_element_type=jnp.float32)

    @pl.when(k == pl.num_programs(2) - 1)
    def _():
        y = acc_ref[...] + b_ref[...].astype(jnp.float32)
        if has_res:
            y = y + res_ref[...].astype(jnp.float32)
        o_ref[...] = y.astype(o_ref.dtype)


def linear(x, w, b, residual=None, *, out_dtype=jnp.bfloat16,
           tm_max=256, tn_max=256, tk_max=512):
    M, K = x.shape
    _, Nc = w.shape
    tm, Mp = _tiles(M, 8, tm_max)
    tn, Np = _tiles(Nc, 128, tn_max)
    tk, Kp = _tiles(K, 128, tk_max)

    xp = _pad2(x.astype(jnp.bfloat16), Mp, Kp)
    wp = _pad2(w.astype(jnp.bfloat16), Kp, Np)
    bp = _pad2(b.reshape(1, -1).astype(jnp.float32), 1, Np)

    args = [xp, wp, bp]
    in_specs = [
        pl.BlockSpec((tm, tk), lambda i, j, k: (i, k)),
        pl.BlockSpec((tk, tn), lambda i, j, k: (k, j)),
        pl.BlockSpec((1, tn), lambda i, j, k: (0, j)),
    ]
    if residual is not None:
        args.append(_pad2(residual.astype(jnp.bfloat16), Mp, Np))
        in_specs.append(pl.BlockSpec((tm, tn), lambda i, j, k: (i, j)))

    out = pl.pallas_call(
        functools.partial(_linear_kernel, has_res=residual is not None),
        out_shape=jax.ShapeDtypeStruct((Mp, Np), out_dtype),
        grid_spec=pltpu.PrefetchScalarGridSpec(
            num_scalar_prefetch=0,
            grid=(Mp // tm, Np // tn, Kp // tk),
            in_specs=in_specs,
            out_specs=pl.BlockSpec((tm, tn), lambda i, j, k: (i, j)),
            scratch_shapes=[pltpu.VMEM((tm, tn), jnp.float32)],
        ),
        compiler_params=pltpu.CompilerParams(
            dimension_semantics=("parallel", "parallel", "arbitrary"),
            vmem_limit_bytes=_VMEM_LIMIT_BYTES),
    )(*args)
    return out[:M, :Nc]


# ---------------------------------------------------------------------------
# Kernel 2: fused LayerNorm -> matmul + bias (+ optional exact GELU)
#   grid = (M/tm, N/tn); K kept whole per block (ViT emb fits VMEM easily).
#   The normalized row-tile is computed once at j==0 and cached in a bf16
#   VMEM scratch reused for every output-column tile (j axis = "arbitrary").
# ---------------------------------------------------------------------------
def _ln_linear_kernel(x_ref, g_ref, bln_ref, w_ref, b_ref, o_ref, xn_sc,
                      *, k_true, eps, activation, need_mask):
    @pl.when(pl.program_id(1) == 0)
    def _():
        x = x_ref[...].astype(jnp.float32)                   # (tm, Kp)
        inv_k = 1.0 / float(k_true)
        mu = jnp.sum(x, axis=-1, keepdims=True) * inv_k      # padded cols are 0
        d = x - mu
        if need_mask:
            mask = jax.lax.broadcasted_iota(jnp.int32, x.shape, 1) < k_true
            d = jnp.where(mask, d, 0.0)
        var = jnp.sum(d * d, axis=-1, keepdims=True) * inv_k
        xn = d * jax.lax.rsqrt(var + eps)
        xn = xn * g_ref[...].astype(jnp.float32) + bln_ref[...].astype(jnp.float32)
        xn_sc[...] = xn.astype(xn_sc.dtype)

    y = jnp.dot(xn_sc[...], w_ref[...], preferred_element_type=jnp.float32)
    y = y + b_ref[...].astype(jnp.float32)
    if activation == "gelu":
        # exact (erf-based) GELU, matching torch.nn.GELU default
        y = 0.5 * y * (1.0 + jax.lax.erf(y * (1.0 / math.sqrt(2.0))))
    o_ref[...] = y.astype(o_ref.dtype)


def ln_linear(x, g, b_ln, w, b, activation=None, *, out_dtype=jnp.bfloat16,
              tm_max=256, tn_max=256):
    M, K = x.shape
    _, Nc = w.shape
    tm, Mp = _tiles(M, 8, tm_max)
    tn, Np = _tiles(Nc, 128, tn_max)
    Kp = _round_up(K, 128)

    xp = _pad2(x.astype(jnp.bfloat16), Mp, Kp)
    gp = _pad2(g.reshape(1, -1).astype(jnp.float32), 1, Kp)
    blnp = _pad2(b_ln.reshape(1, -1).astype(jnp.float32), 1, Kp)
    wp = _pad2(w.astype(jnp.bfloat16), Kp, Np)
    bp = _pad2(b.reshape(1, -1).astype(jnp.float32), 1, Np)

    out = pl.pallas_call(
        functools.partial(_ln_linear_kernel, k_true=K, eps=1e-5,
                          activation=activation, need_mask=(Kp != K)),
        out_shape=jax.ShapeDtypeStruct((Mp, Np), out_dtype),
        grid_spec=pltpu.PrefetchScalarGridSpec(
            num_scalar_prefetch=0,
            grid=(Mp // tm, Np // tn),
            in_specs=[
                pl.BlockSpec((tm, Kp), lambda i, j: (i, 0)),
                pl.BlockSpec((1, Kp), lambda i, j: (0, 0)),
                pl.BlockSpec((1, Kp), lambda i, j: (0, 0)),
                pl.BlockSpec((Kp, tn), lambda i, j: (0, j)),
                pl.BlockSpec((1, tn), lambda i, j: (0, j)),
            ],
            out_specs=pl.BlockSpec((tm, tn), lambda i, j: (i, j)),
            scratch_shapes=[pltpu.VMEM((tm, Kp), jnp.bfloat16)],
        ),
        compiler_params=pltpu.CompilerParams(
            dimension_semantics=("parallel", "arbitrary"),
            vmem_limit_bytes=_VMEM_LIMIT_BYTES),
    )(xp, gp, blnp, wp, bp)
    return out[:M, :Nc]


# ---------------------------------------------------------------------------
# Kernel 3: flash-style attention with online softmax
#   grid = (B*heads, q-tile, kv-tile); m/l/acc scratch in VMEM
# ---------------------------------------------------------------------------
def _flash_attn_kernel(q_ref, k_ref, v_ref, o_ref, m_sc, l_sc, acc_sc,
                       *, scale, n_true, tkv, need_mask):
    kv = pl.program_id(2)

    @pl.when(kv == 0)
    def _():
        m_sc[...] = jnp.full_like(m_sc, -1e30)
        l_sc[...] = jnp.zeros_like(l_sc)
        acc_sc[...] = jnp.zeros_like(acc_sc)

    q = q_ref[0]                                             # (tq, Dp) bf16
    k = k_ref[0]                                             # (tkv, Dp) bf16
    s = jax.lax.dot_general(q, k, (((1,), (1,)), ((), ())),
                            preferred_element_type=jnp.float32) * scale
    if need_mask:
        key_idx = kv * tkv + jax.lax.broadcasted_iota(jnp.int32, s.shape, 1)
        s = jnp.where(key_idx < n_true, s, -1e30)            # mask padded keys

    m_prev = m_sc[...]
    m_new = jnp.maximum(m_prev, jnp.max(s, axis=-1, keepdims=True))
    alpha = jnp.exp(m_prev - m_new)
    p = jnp.exp(s - m_new)
    l_sc[...] = alpha * l_sc[...] + jnp.sum(p, axis=-1, keepdims=True)
    acc_sc[...] = alpha * acc_sc[...] + jnp.dot(
        p.astype(jnp.bfloat16), v_ref[0], preferred_element_type=jnp.float32)
    m_sc[...] = m_new

    @pl.when(kv == pl.num_programs(2) - 1)
    def _():
        inv = pl.reciprocal(l_sc[...], approx=True)
        o_ref[0] = (acc_sc[...] * inv).astype(o_ref.dtype)


def flash_attention(q, k, v, scale, *, t_max=256):
    BH, N, D = q.shape
    tq, Np = _tiles(N, 8, t_max)
    tkv = tq
    Dp = _round_up(D, 128)

    def pad3(a):
        return jnp.pad(a.astype(jnp.bfloat16),
                       ((0, 0), (0, Np - N), (0, Dp - D)))

    qp, kp, vp = pad3(q), pad3(k), pad3(v)
    out = pl.pallas_call(
        functools.partial(_flash_attn_kernel, scale=scale, n_true=N,
                          tkv=tkv, need_mask=(Np != N)),
        out_shape=jax.ShapeDtypeStruct((BH, Np, Dp), jnp.bfloat16),
        grid_spec=pltpu.PrefetchScalarGridSpec(
            num_scalar_prefetch=0,
            grid=(BH, Np // tq, Np // tkv),
            in_specs=[
                pl.BlockSpec((1, tq, Dp), lambda b, i, kv: (b, i, 0)),
                pl.BlockSpec((1, tkv, Dp), lambda b, i, kv: (b, kv, 0)),
                pl.BlockSpec((1, tkv, Dp), lambda b, i, kv: (b, kv, 0)),
            ],
            out_specs=pl.BlockSpec((1, tq, Dp), lambda b, i, kv: (b, i, 0)),
            scratch_shapes=[pltpu.VMEM((tq, 1), jnp.float32),
                            pltpu.VMEM((tq, 1), jnp.float32),
                            pltpu.VMEM((tq, Dp), jnp.float32)],
        ),
        compiler_params=pltpu.CompilerParams(
            dimension_semantics=("parallel", "parallel", "arbitrary"),
            vmem_limit_bytes=_VMEM_LIMIT_BYTES),
    )(qp, kp, vp)
    return out[:, :N, :D]


# ---------------------------------------------------------------------------
# Parameter construction (deterministic, synthetic MAE ViT encoder)
# ---------------------------------------------------------------------------
def init_params(key, *, img_ch, img_size, patch, emb, layers, num_classes):
    T = (img_size // patch) ** 2
    keys = iter(jax.random.split(key, 8 + 8 * layers))

    def nrm(shape, std=0.05):
        return jax.random.normal(next(keys), shape, jnp.float32) * std

    params = {
        "patch_w": nrm((emb, img_ch, patch, patch)),   # Conv2d weight (O, C, p, p)
        "patch_b": nrm((emb,), std=0.02),
        "cls_token": nrm((1, 1, emb), std=0.02),
        "pos_embedding": nrm((T, 1, emb), std=0.02),
        "ln_g": jnp.ones((emb,), jnp.float32),
        "ln_b": jnp.zeros((emb,), jnp.float32),
        "head_w": nrm((emb, num_classes)),
        "head_b": jnp.zeros((num_classes,), jnp.float32),
        "blocks": [],
    }
    for _ in range(layers):
        params["blocks"].append({
            "n1_g": jnp.ones((emb,), jnp.float32), "n1_b": jnp.zeros((emb,), jnp.float32),
            "qkv_w": nrm((emb, 3 * emb)), "qkv_b": jnp.zeros((3 * emb,), jnp.float32),
            "proj_w": nrm((emb, emb)), "proj_b": jnp.zeros((emb,), jnp.float32),
            "n2_g": jnp.ones((emb,), jnp.float32), "n2_b": jnp.zeros((emb,), jnp.float32),
            "fc1_w": nrm((emb, 4 * emb)), "fc1_b": jnp.zeros((4 * emb,), jnp.float32),
            "fc2_w": nrm((4 * emb, emb)), "fc2_b": jnp.zeros((emb,), jnp.float32),
        })
    return params


# ---------------------------------------------------------------------------
# Forward pass (mirrors MAELinearProbing.forward)
# ---------------------------------------------------------------------------
def mae_linear_probing_forward(params, img, *, patch, heads):
    B, C, H, W = img.shape
    Hp, Wp = H // patch, W // patch
    T = Hp * Wp
    N = T + 1
    emb = params["cls_token"].shape[-1]
    hd = emb // heads
    scale = 1.0 / math.sqrt(hd)

    # ---- patchify: Conv2d(kernel=stride=patch) as unfold + tiled matmul ----
    # TODO(synk): the unfold gather could be expressed via the matmul's
    # index_map (Element blocks per row) instead of a JAX transpose.
    x = img.reshape(B, C, Hp, patch, Wp, patch)
    x = x.transpose(0, 2, 4, 1, 3, 5).reshape(B * T, C * patch * patch)
    w_patch = params["patch_w"].reshape(emb, C * patch * patch).T
    patches = linear(x, w_patch, params["patch_b"])            # (B*T, emb) bf16
    patches = patches.reshape(B, T, emb)                       # b t c layout directly

    # pos add + cls concat (equivalent to the (h w) b c rearrange path)
    pos = params["pos_embedding"][:, 0, :][None]               # (1, T, emb)
    cls = jnp.broadcast_to(params["cls_token"].reshape(1, 1, emb), (B, 1, emb))
    tokens = jnp.concatenate([cls, patches + pos], axis=1).astype(jnp.bfloat16)

    xf = tokens.reshape(B * N, emb)                            # residual stream (bf16)

    # ---- pre-norm transformer blocks, LN/residual fused into the matmuls ----
    for blk in params["blocks"]:
        qkv = ln_linear(xf, blk["n1_g"], blk["n1_b"],
                        blk["qkv_w"], blk["qkv_b"])            # (B*N, 3*emb)
        qkv = qkv.reshape(B, N, 3, heads, hd).transpose(2, 0, 3, 1, 4)
        q = qkv[0].reshape(B * heads, N, hd)
        k = qkv[1].reshape(B * heads, N, hd)
        v = qkv[2].reshape(B * heads, N, hd)
        o = flash_attention(q, k, v, scale)                    # (B*heads, N, hd)
        o = o.reshape(B, heads, N, hd).transpose(0, 2, 1, 3).reshape(B * N, emb)
        xf = linear(o, blk["proj_w"], blk["proj_b"], residual=xf)

        h = ln_linear(xf, blk["n2_g"], blk["n2_b"],
                      blk["fc1_w"], blk["fc1_b"], activation="gelu")
        xf = linear(h, blk["fc2_w"], blk["fc2_b"], residual=xf)

    # ---- final LayerNorm + head fused into one kernel on the cls token ----
    # (LayerNorm is per-token, so applying it only to the cls token is exact.)
    cls_feat = xf.reshape(B, N, emb)[:, 0, :]                  # (B, emb)
    logits = ln_linear(cls_feat, params["ln_g"], params["ln_b"],
                       params["head_w"], params["head_b"],
                       out_dtype=jnp.float32)                  # (B, num_classes)
    return logits


if __name__ == "__main__":
    key = jax.random.PRNGKey(0)
    pkey, xkey = jax.random.split(key)

    B, C, H, W = 2, 3, 16, 16
    patch, emb, heads, layers, num_classes = 4, 32, 2, 2, 10

    params = init_params(pkey, img_ch=C, img_size=H, patch=patch, emb=emb,
                         layers=layers, num_classes=num_classes)
    img = jax.random.normal(xkey, (B, C, H, W), jnp.float32)

    fwd = jax.jit(functools.partial(mae_linear_probing_forward,
                                    patch=patch, heads=heads))
    logits = fwd(params, img)
    jax.block_until_ready(logits)
    assert logits.shape == (B, num_classes), logits.shape
    assert bool(jnp.all(jnp.isfinite(logits)))
    print("KERNEL_OK")
</pallas_src>

<mosaic_0001>
module attributes {stable_mosaic.version = 11 : i64} {
  func.func @_linear_kernel(%arg0: i32, %arg1: i32, %arg2: i32, %arg3: memref<32x128xbf16, #tpu.memory_space<vmem>>, %arg4: memref<128x128xbf16, #tpu.memory_space<vmem>>, %arg5: memref<1x128xf32, #tpu.memory_space<vmem>>, %arg6: memref<32x128xbf16, #tpu.memory_space<vmem>>, %arg7: memref<32x128xf32, #tpu.memory_space<vmem>>) attributes {dimension_semantics = [#tpu.dimension_semantics<parallel>, #tpu.dimension_semantics<parallel>, #tpu.dimension_semantics<arbitrary>], iteration_bounds = array<i64: 1, 1, 1>, scalar_prefetch = 0 : i64, scratch_operands = 1 : i64, tpu.core_type = #tpu.core_type<tc>, window_params = [{transform_indices = @transform_0, window_bounds = array<i64: 32, 128>}, {transform_indices = @transform_1, window_bounds = array<i64: 128, 128>}, {transform_indices = @transform_2, window_bounds = array<i64: 1, 128>}, {transform_indices = @transform_3, window_bounds = array<i64: 32, 128>}]} {
    %c0_i32 = arith.constant 0 : i32
    %0 = arith.cmpi eq, %arg2, %c0_i32 : i32
    %1 = arith.extui %0 : i1 to i32
    %c0_i32_0 = arith.constant 0 : i32
    %2 = arith.cmpi ne, %1, %c0_i32_0 : i32
    scf.if %2 {
      %cst_10 = arith.constant 0.000000e+00 : f32
      %12 = vector.broadcast %cst_10 : f32 to vector<32x128xf32>
      %c0_11 = arith.constant 0 : index
      %c0_12 = arith.constant 0 : index
      %13 = vector.load %arg7[%c0_11, %c0_12] : memref<32x128xf32, #tpu.memory_space<vmem>>, vector<32x128xf32>
      tpu.vector_store %arg7[%c0_11, %c0_12], %12 {strides = array<i32>} : memref<32x128xf32, #tpu.memory_space<vmem>>, vector<32x128xf32>,
    } else {
    }
    %c0 = arith.constant 0 : index
    %c0_1 = arith.constant 0 : index
    %3 = vector.load %arg7[%c0, %c0_1] : memref<32x128xf32, #tpu.memory_space<vmem>>, vector<32x128xf32>
    %c0_2 = arith.constant 0 : index
    %c0_3 = arith.constant 0 : index
    %4 = vector.load %arg3[%c0_2, %c0_3] : memref<32x128xbf16, #tpu.memory_space<vmem>>, vector<32x128xbf16>
    %c0_4 = arith.constant 0 : index
    %c0_5 = arith.constant 0 : index
    %5 = vector.load %arg4[%c0_4, %c0_5] : memref<128x128xbf16, #tpu.memory_space<vmem>>, vector<128x128xbf16>
    %cst = arith.constant dense<0.000000e+00> : vector<32x128xf32>
    %6 = tpu.matmul %4, %5, %cst {dimension_numbers = #tpu.dot_dimension_numbers<[1], [0], [0], [1], [0, 0, 1, 1], [], []>} : vector<32x128xbf16>, vector<128x128xbf16>, vector<32x128xf32> -> vector<32x128xf32>
    %7 = arith.addf %3, %6 : vector<32x128xf32>
    %c0_6 = arith.constant 0 : index
    %c0_7 = arith.constant 0 : index
    %8 = vector.load %arg7[%c0_6, %c0_7] : memref<32x128xf32, #tpu.memory_space<vmem>>, vector<32x128xf32>
    tpu.vector_store %arg7[%c0_6, %c0_7], %7 {strides = array<i32>} : memref<32x128xf32, #tpu.memory_space<vmem>>, vector<32x128xf32>,
    %c0_i32_8 = arith.constant 0 : i32
    %9 = arith.cmpi eq, %arg2, %c0_i32_8 : i32
    %10 = arith.extui %9 : i1 to i32
    %c0_i32_9 = arith.constant 0 : i32
    %11 = arith.cmpi ne, %10, %c0_i32_9 : i32
    scf.if %11 {
      %c0_10 = arith.constant 0 : index
      %c0_11 = arith.constant 0 : index
      %12 = vector.load %arg7[%c0_10, %c0_11] : memref<32x128xf32, #tpu.memory_space<vmem>>, vector<32x128xf32>
      %c0_12 = arith.constant 0 : index
      %c0_13 = arith.constant 0 : index
      %13 = vector.load %arg5[%c0_12, %c0_13] : memref<1x128xf32, #tpu.memory_space<vmem>>, vector<1x128xf32>
      %14 = vector.broadcast %13 : vector<1x128xf32> to vector<32x128xf32>
      %15 = arith.addf %12, %14 : vector<32x128xf32>
      %16 = arith.truncf %15 : vector<32x128xf32> to vector<32x128xbf16>
      %c0_14 = arith.constant 0 : index
      %c0_15 = arith.constant 0 : index
      %17 = vector.load %arg6[%c0_14, %c0_15] : memref<32x128xbf16, #tpu.memory_space<vmem>>, vector<32x128xbf16>
      tpu.vector_store %arg6[%c0_14, %c0_15], %16 {strides = array<i32>} : memref<32x128xbf16, #tpu.memory_space<vmem>>, vector<32x128xbf16>,
    } else {
    }
    return
  }
  func.func @transform_0(%arg0: i32, %arg1: i32, %arg2: i32) -> (i32, i32) {
    %c0_i32 = arith.constant 0 : i32
    return %arg0, %arg2 : i32, i32
  }
  func.func @transform_1(%arg0: i32, %arg1: i32, %arg2: i32) -> (i32, i32) {
    %c0_i32 = arith.constant 0 : i32
    return %arg2, %arg1 : i32, i32
  }
  func.func @transform_2(%arg0: i32, %arg1: i32, %arg2: i32) -> (i32, i32) {
    %c0_i32 = arith.constant 0 : i32
    %c0_i32_0 = arith.constant 0 : i32
    return %c0_i32, %arg1 : i32, i32
  }
  func.func @transform_3(%arg0: i32, %arg1: i32, %arg2: i32) -> (i32, i32) {
    %c0_i32 = arith.constant 0 : i32
    return %arg0, %arg1 : i32, i32
  }
}

module attributes {stable_mosaic.version = 11 : i64} {
  func.func @_ln_linear_kernel(%arg0: i32, %arg1: i32, %arg2: memref<40x128xbf16, #tpu.memory_space<vmem>>, %arg3: memref<1x128xf32, #tpu.memory_space<vmem>>, %arg4: memref<1x128xf32, #tpu.memory_space<vmem>>, %arg5: memref<128x128xbf16, #tpu.memory_space<vmem>>, %arg6: memref<1x128xf32, #tpu.memory_space<vmem>>, %arg7: memref<40x128xbf16, #tpu.memory_space<vmem>>, %arg8: memref<40x128xbf16, #tpu.memory_space<vmem>>) attributes {dimension_semantics = [#tpu.dimension_semantics<parallel>, #tpu.dimension_semantics<arbitrary>], iteration_bounds = array<i64: 1, 1>, scalar_prefetch = 0 : i64, scratch_operands = 1 : i64, tpu.core_type = #tpu.core_type<tc>, window_params = [{transform_indices = @transform_0, window_bounds = array<i64: 40, 128>}, {pipeline_mode = #tpu.pipeline_mode<synchronous>, transform_indices = @transform_1, window_bounds = array<i64: 1, 128>}, {pipeline_mode = #tpu.pipeline_mode<synchronous>, transform_indices = @transform_2, window_bounds = array<i64: 1, 128>}, {transform_indices = @transform_3, window_bounds = array<i64: 128, 128>}, {transform_indices = @transform_4, window_bounds = array<i64: 1, 128>}, {transform_indices = @transform_5, window_bounds = array<i64: 40, 128>}]} {
    %c0_i32 = arith.constant 0 : i32
    %0 = arith.cmpi eq, %arg1, %c0_i32 : i32
    %1 = arith.extui %0 : i1 to i32
    %c0_i32_0 = arith.constant 0 : i32
    %2 = arith.cmpi ne, %1, %c0_i32_0 : i32
    scf.if %2 {
      %c0_8 = arith.constant 0 : index
      %c0_9 = arith.constant 0 : index
      %11 = vector.load %arg2[%c0_8, %c0_9] : memref<40x128xbf16, #tpu.memory_space<vmem>>, vector<40x128xbf16>
      %12 = arith.extf %11 : vector<40x128xbf16> to vector<40x128xf32>
      %cst_10 = arith.constant dense<0.000000e+00> : vector<40xf32>
      %13 = vector.multi_reduction <add>, %12, %cst_10 [1] : vector<40x128xf32> to vector<40xf32>
      %14 = vector.shape_cast %13 : vector<40xf32> to vector<40x1xf32>
      %cst_11 = arith.constant 3.125000e-02 : f32
      %15 = vector.broadcast %cst_11 : f32 to vector<40x1xf32>
      %16 = arith.mulf %14, %15 : vector<40x1xf32>
      %17 = vector.broadcast %16 : vector<40x1xf32> to vector<40x128xf32>
      %18 = arith.subf %12, %17 : vector<40x128xf32>
      %19 = tpu.iota {dimensions = array<i32: 1>} : vector<40x128xi32>
      %c32_i32 = arith.constant 32 : i32
      %20 = vector.broadcast %c32_i32 : i32 to vector<40x128xi32>
      %21 = arith.cmpi slt, %19, %20 : vector<40x128xi32>
      %cst_12 = arith.constant 0.000000e+00 : f32
      %22 = vector.broadcast %cst_12 : f32 to vector<40x128xf32>
      %23 = arith.select %21, %18, %22 : vector<40x128xi1>, vector<40x128xf32>
      %24 = arith.mulf %23, %23 : vector<40x128xf32>
      %cst_13 = arith.constant dense<0.000000e+00> : vector<40xf32>
      %25 = vector.multi_reduction <add>, %24, %cst_13 [1] : vector<40x128xf32> to vector<40xf32>
      %26 = vector.shape_cast %25 : vector<40xf32> to vector<40x1xf32>
      %cst_14 = arith.constant 3.125000e-02 : f32
      %27 = vector.broadcast %cst_14 : f32 to vector<40x1xf32>
      %28 = arith.mulf %26, %27 : vector<40x1xf32>
      %cst_15 = arith.constant 9.99999974E-6 : f32
      %29 = vector.broadcast %cst_15 : f32 to vector<40x1xf32>
      %30 = arith.addf %28, %29 : vector<40x1xf32>
      %31 = math.rsqrt %30 : vector<40x1xf32>
      %32 = vector.broadcast %31 : vector<40x1xf32> to vector<40x128xf32>
      %33 = arith.mulf %23, %32 : vector<40x128xf32>
      %c0_16 = arith.constant 0 : index
      %c0_17 = arith.constant 0 : index
      %34 = vector.load %arg3[%c0_16, %c0_17] : memref<1x128xf32, #tpu.memory_space<vmem>>, vector<1x128xf32>
      %35 = vector.broadcast %34 : vector<1x128xf32> to vector<40x128xf32>
      %36 = arith.mulf %33, %35 : vector<40x128xf32>
      %c0_18 = arith.constant 0 : index
      %c0_19 = arith.constant 0 : index
      %37 = vector.load %arg4[%c0_18, %c0_19] : memref<1x128xf32, #tpu.memory_space<vmem>>, vector<1x128xf32>
      %38 = vector.broadcast %37 : vector<1x128xf32> to vector<40x128xf32>
      %39 = arith.addf %36, %38 : vector<40x128xf32>
      %40 = arith.truncf %39 : vector<40x128xf32> to vector<40x128xbf16>
      %c0_20 = arith.constant 0 : index
      %c0_21 = arith.constant 0 : index
      %41 = vector.load %arg8[%c0_20, %c0_21] : memref<40x128xbf16, #tpu.memory_space<vmem>>, vector<40x128xbf16>
      tpu.vector_store %arg8[%c0_20, %c0_21], %40 {strides = array<i32>} : memref<40x128xbf16, #tpu.memory_space<vmem>>, vector<40x128xbf16>,
    } else {
    }
    %c0 = arith.constant 0 : index
    %c0_1 = arith.constant 0 : index
    %3 = vector.load %arg8[%c0, %c0_1] : memref<40x128xbf16, #tpu.memory_space<vmem>>, vector<40x128xbf16>
    %c0_2 = arith.constant 0 : index
    %c0_3 = arith.constant 0 : index
    %4 = vector.load %arg5[%c0_2, %c0_3] : memref<128x128xbf16, #tpu.memory_space<vmem>>, vector<128x128xbf16>
    %cst = arith.constant dense<0.000000e+00> : vector<40x128xf32>
    %5 = tpu.matmul %3, %4, %cst {dimension_numbers = #tpu.dot_dimension_numbers<[1], [0], [0], [1], [0, 0, 1, 1], [], []>} : vector<40x128xbf16>, vector<128x128xbf16>, vector<40x128xf32> -> vector<40x128xf32>
    %c0_4 = arith.constant 0 : index
    %c0_5 = arith.constant 0 : index
    %6 = vector.load %arg6[%c0_4, %c0_5] : memref<1x128xf32, #tpu.memory_space<vmem>>, vector<1x128xf32>
    %7 = vector.broadcast %6 : vector<1x128xf32> to vector<40x128xf32>
    %8 = arith.addf %5, %7 : vector<40x128xf32>
    %9 = arith.truncf %8 : vector<40x128xf32> to vector<40x128xbf16>
    %c0_6 = arith.constant 0 : index
    %c0_7 = arith.constant 0 : index
    %10 = vector.load %arg7[%c0_6, %c0_7] : memref<40x128xbf16, #tpu.memory_space<vmem>>, vector<40x128xbf16>
    tpu.vector_store %arg7[%c0_6, %c0_7], %9 {strides = array<i32>} : memref<40x128xbf16, #tpu.memory_space<vmem>>, vector<40x128xbf16>,
    return
  }
  func.func @transform_0(%arg0: i32, %arg1: i32) -> (i32, i32) {
    %c0_i32 = arith.constant 0 : i32
    %c0_i32_0 = arith.constant 0 : i32
    return %arg0, %c0_i32 : i32, i32
  }
  func.func @transform_1(%arg0: i32, %arg1: i32) -> (i32, i32) {
    %c0_i32 = arith.constant 0 : i32
    %c0_i32_0 = arith.constant 0 : i32
    %c0_i32_1 = arith.constant 0 : i32
    return %c0_i32, %c0_i32_0 : i32, i32
  }
  func.func @transform_2(%arg0: i32, %arg1: i32) -> (i32, i32) {
    %c0_i32 = arith.constant 0 : i32
    %c0_i32_0 = arith.constant 0 : i32
    %c0_i32_1 = arith.constant 0 : i32
    return %c0_i32, %c0_i32_0 : i32, i32
  }
  func.func @transform_3(%arg0: i32, %arg1: i32) -> (i32, i32) {
    %c0_i32 = arith.constant 0 : i32
    %c0_i32_0 = arith.constant 0 : i32
    return %c0_i32, %arg1 : i32, i32
  }
  func.func @transform_4(%arg0: i32, %arg1: i32) -> (i32, i32) {
    %c0_i32 = arith.constant 0 : i32
    %c0_i32_0 = arith.constant 0 : i32
    return %c0_i32, %arg1 : i32, i32
  }
  func.func @transform_5(%arg0: i32, %arg1: i32) -> (i32, i32) {
    %c0_i32 = arith.constant 0 : i32
    return %arg0, %arg1 : i32, i32
  }
}

module attributes {stable_mosaic.version = 11 : i64} {
  func.func @_flash_attn_kernel(%arg0: i32, %arg1: i32, %arg2: i32, %arg3: memref<1x24x128xbf16, #tpu.memory_space<vmem>>, %arg4: memref<1x24x128xbf16, #tpu.memory_space<vmem>>, %arg5: memref<1x24x128xbf16, #tpu.memory_space<vmem>>, %arg6: memref<1x24x128xbf16, #tpu.memory_space<vmem>>, %arg7: memref<24x1xf32, #tpu.memory_space<vmem>>, %arg8: memref<24x1xf32, #tpu.memory_space<vmem>>, %arg9: memref<24x128xf32, #tpu.memory_space<vmem>>) attributes {dimension_semantics = [#tpu.dimension_semantics<parallel>, #tpu.dimension_semantics<parallel>, #tpu.dimension_semantics<arbitrary>], iteration_bounds = array<i64: 4, 1, 1>, scalar_prefetch = 0 : i64, scratch_operands = 3 : i64, tpu.core_type = #tpu.core_type<tc>, window_params = [{transform_indices = @transform_0, window_bounds = array<i64: 1, 24, 128>}, {transform_indices = @transform_1, window_bounds = array<i64: 1, 24, 128>}, {transform_indices = @transform_2, window_bounds = array<i64: 1, 24, 128>}, {transform_indices = @transform_3, window_bounds = array<i64: 1, 24, 128>}]} {
    %c0_i32 = arith.constant 0 : i32
    %0 = arith.cmpi eq, %arg2, %c0_i32 : i32
    %1 = arith.extui %0 : i1 to i32
    %c0_i32_0 = arith.constant 0 : i32
    %2 = arith.cmpi ne, %1, %c0_i32_0 : i32
    scf.if %2 {
      %cst_28 = arith.constant -1.000000e+30 : f32
      %46 = vector.broadcast %cst_28 : f32 to vector<24x1xf32>
      %c0_29 = arith.constant 0 : index
      %c0_30 = arith.constant 0 : index
      %47 = vector.load %arg7[%c0_29, %c0_30] : memref<24x1xf32, #tpu.memory_space<vmem>>, vector<24x1xf32>
      tpu.vector_store %arg7[%c0_29, %c0_30], %46 {strides = array<i32>} : memref<24x1xf32, #tpu.memory_space<vmem>>, vector<24x1xf32>,
      %cst_31 = arith.constant 0.000000e+00 : f32
      %48 = vector.broadcast %cst_31 : f32 to vector<24x1xf32>
      %c0_32 = arith.constant 0 : index
      %c0_33 = arith.constant 0 : index
      %49 = vector.load %arg8[%c0_32, %c0_33] : memref<24x1xf32, #tpu.memory_space<vmem>>, vector<24x1xf32>
      tpu.vector_store %arg8[%c0_32, %c0_33], %48 {strides = array<i32>} : memref<24x1xf32, #tpu.memory_space<vmem>>, vector<24x1xf32>,
      %cst_34 = arith.constant 0.000000e+00 : f32
      %50 = vector.broadcast %cst_34 : f32 to vector<24x128xf32>
      %c0_35 = arith.constant 0 : index
      %c0_36 = arith.constant 0 : index
      %51 = vector.load %arg9[%c0_35, %c0_36] : memref<24x128xf32, #tpu.memory_space<vmem>>, vector<24x128xf32>
      tpu.vector_store %arg9[%c0_35, %c0_36], %50 {strides = array<i32>} : memref<24x128xf32, #tpu.memory_space<vmem>>, vector<24x128xf32>,
    } else {
    }
    %c0 = arith.constant 0 : index
    %c0_1 = arith.constant 0 : index
    %c0_2 = arith.constant 0 : index
    %3 = vector.load %arg3[%c0, %c0_1, %c0_2] : memref<1x24x128xbf16, #tpu.memory_space<vmem>>, vector<1x24x128xbf16>
    %4 = vector.shape_cast %3 : vector<1x24x128xbf16> to vector<24x128xbf16>
    %c0_3 = arith.constant 0 : index
    %c0_4 = arith.constant 0 : index
    %c0_5 = arith.constant 0 : index
    %5 = vector.load %arg4[%c0_3, %c0_4, %c0_5] : memref<1x24x128xbf16, #tpu.memory_space<vmem>>, vector<1x24x128xbf16>
    %6 = vector.shape_cast %5 : vector<1x24x128xbf16> to vector<24x128xbf16>
    %cst = arith.constant dense<0.000000e+00> : vector<24x24xf32>
    %7 = tpu.matmul %4, %6, %cst {dimension_numbers = #tpu.dot_dimension_numbers<[1], [1], [0], [0], [0, 0, 1, 0], [], []>} : vector<24x128xbf16>, vector<24x128xbf16>, vector<24x24xf32> -> vector<24x24xf32>
    %cst_6 = arith.constant 2.500000e-01 : f32
    %8 = vector.broadcast %cst_6 : f32 to vector<24x24xf32>
    %9 = arith.mulf %7, %8 : vector<24x24xf32>
    %c24_i32 = arith.constant 24 : i32
    %10 = arith.muli %arg2, %c24_i32 : i32
    %11 = tpu.iota {dimensions = array<i32: 1>} : vector<24x24xi32>
    %12 = vector.broadcast %10 : i32 to vector<24x24xi32>
    %13 = arith.addi %12, %11 : vector<24x24xi32>
    %c17_i32 = arith.constant 17 : i32
    %14 = vector.broadcast %c17_i32 : i32 to vector<24x24xi32>
    %15 = arith.cmpi slt, %13, %14 : vector<24x24xi32>
    %cst_7 = arith.constant -1.000000e+30 : f32
    %16 = vector.broadcast %cst_7 : f32 to vector<24x24xf32>
    %17 = arith.select %15, %9, %16 : vector<24x24xi1>, vector<24x24xf32>
    %c0_8 = arith.constant 0 : index
    %c0_9 = arith.constant 0 : index
    %18 = vector.load %arg7[%c0_8, %c0_9] : memref<24x1xf32, #tpu.memory_space<vmem>>, vector<24x1xf32>
    %cst_10 = arith.constant dense<0xFF800000> : vector<24xf32>
    %19 = vector.multi_reduction <maximumf>, %17, %cst_10 [1] : vector<24x24xf32> to vector<24xf32>
    %20 = vector.shape_cast %19 : vector<24xf32> to vector<24x1xf32>
    %21 = arith.maximumf %18, %20 : vector<24x1xf32>
    %22 = arith.subf %18, %21 : vector<24x1xf32>
    %23 = math.exp %22 : vector<24x1xf32>
    %24 = vector.broadcast %21 : vector<24x1xf32> to vector<24x24xf32>
    %25 = arith.subf %17, %24 : vector<24x24xf32>
    %26 = math.exp %25 : vector<24x24xf32>
    %c0_11 = arith.constant 0 : index
    %c0_12 = arith.constant 0 : index
    %27 = vector.load %arg8[%c0_11, %c0_12] : memref<24x1xf32, #tpu.memory_space<vmem>>, vector<24x1xf32>
    %28 = arith.mulf %23, %27 : vector<24x1xf32>
    %cst_13 = arith.constant dense<0.000000e+00> : vector<24xf32>
    %29 = vector.multi_reduction <add>, %26, %cst_13 [1] : vector<24x24xf32> to vector<24xf32>
    %30 = vector.shape_cast %29 : vector<24xf32> to vector<24x1xf32>
    %31 = arith.addf %28, %30 : vector<24x1xf32>
    %c0_14 = arith.constant 0 : index
    %c0_15 = arith.constant 0 : index
    %32 = vector.load %arg8[%c0_14, %c0_15] : memref<24x1xf32, #tpu.memory_space<vmem>>, vector<24x1xf32>
    tpu.vector_store %arg8[%c0_14, %c0_15], %31 {strides = array<i32>} : memref<24x1xf32, #tpu.memory_space<vmem>>, vector<24x1xf32>,
    %c0_16 = arith.constant 0 : index
    %c0_17 = arith.constant 0 : index
    %33 = vector.load %arg9[%c0_16, %c0_17] : memref<24x128xf32, #tpu.memory_space<vmem>>, vector<24x128xf32>
    %34 = vector.broadcast %23 : vector<24x1xf32> to vector<24x128xf32>
    %35 = arith.mulf %34, %33 : vector<24x128xf32>
    %36 = arith.truncf %26 : vector<24x24xf32> to vector<24x24xbf16>
    %c0_18 = arith.constant 0 : index
    %c0_19 = arith.constant 0 : index
    %c0_20 = arith.constant 0 : index
    %37 = vector.load %arg5[%c0_18, %c0_19, %c0_20] : memref<1x24x128xbf16, #tpu.memory_space<vmem>>, vector<1x24x128xbf16>
    %38 = vector.shape_cast %37 : vector<1x24x128xbf16> to vector<24x128xbf16>
    %cst_21 = arith.constant dense<0.000000e+00> : vector<24x128xf32>
    %39 = tpu.matmul %36, %38, %cst_21 {dimension_numbers = #tpu.dot_dimension_numbers<[1], [0], [0], [1], [0, 0, 1, 1], [], []>} : vector<24x24xbf16>, vector<24x128xbf16>, vector<24x128xf32> -> vector<24x128xf32>
    %40 = arith.addf %35, %39 : vector<24x128xf32>
    %c0_22 = arith.constant 0 : index
    %c0_23 = arith.constant 0 : index
    %41 = vector.load %arg9[%c0_22, %c0_23] : memref<24x128xf32, #tpu.memory_space<vmem>>, vector<24x128xf32>
    tpu.vector_store %arg9[%c0_22, %c0_23], %40 {strides = array<i32>} : memref<24x128xf32, #tpu.memory_space<vmem>>, vector<24x128xf32>,
    %c0_24 = arith.constant 0 : index
    %c0_25 = arith.constant 0 : index
    %42 = vector.load %arg7[%c0_24, %c0_25] : memref<24x1xf32, #tpu.memory_space<vmem>>, vector<24x1xf32>
    tpu.vector_store %arg7[%c0_24, %c0_25], %21 {strides = array<i32>} : memref<24x1xf32, #tpu.memory_space<vmem>>, vector<24x1xf32>,
    %c0_i32_26 = arith.constant 0 : i32
    %43 = arith.cmpi eq, %arg2, %c0_i32_26 : i32
    %44 = arith.extui %43 : i1 to i32
    %c0_i32_27 = arith.constant 0 : i32
    %45 = arith.cmpi ne, %44, %c0_i32_27 : i32
    scf.if %45 {
      %c0_28 = arith.constant 0 : index
      %c0_29 = arith.constant 0 : index
      %46 = vector.load %arg8[%c0_28, %c0_29] : memref<24x1xf32, #tpu.memory_space<vmem>>, vector<24x1xf32>
      %47 = tpu.reciprocal %46 {approx = true} : vector<24x1xf32> -> vector<24x1xf32>
      %c0_30 = arith.constant 0 : index
      %c0_31 = arith.constant 0 : index
      %48 = vector.load %arg9[%c0_30, %c0_31] : memref<24x128xf32, #tpu.memory_space<vmem>>, vector<24x128xf32>
      %49 = vector.broadcast %47 : vector<24x1xf32> to vector<24x128xf32>
      %50 = arith.mulf %48, %49 : vector<24x128xf32>
      %51 = arith.truncf %50 : vector<24x128xf32> to vector<24x128xbf16>
      %c0_32 = arith.constant 0 : index
      %c0_33 = arith.constant 0 : index
      %c0_34 = arith.constant 0 : index
      %52 = vector.load %arg6[%c0_32, %c0_33, %c0_34] : memref<1x24x128xbf16, #tpu.memory_space<vmem>>, vector<1x24x128xbf16>
      %53 = vector.shape_cast %52 : vector<1x24x128xbf16> to vector<24x128xbf16>
      %54 = vector.shape_cast %51 : vector<24x128xbf16> to vector<1x24x128xbf16>
      tpu.vector_store %arg6[%c0_32, %c0_33, %c0_34], %54 {strides = array<i32>} : memref<1x24x128xbf16, #tpu.memory_space<vmem>>, vector<1x24x128xbf16>,
    } else {
    }
    return
  }
  func.func @transform_0(%arg0: i32, %arg1: i32, %arg2: i32) -> (i32, i32, i32) {
    %c0_i32 = arith.constant 0 : i32
    %c0_i32_0 = arith.constant 0 : i32
    return %arg0, %arg1, %c0_i32 : i32, i32, i32
  }
  func.func @transform_1(%arg0: i32, %arg1: i32, %arg2: i32) -> (i32, i32, i32) {
    %c0_i32 = arith.constant 0 : i32
    %c0_i32_0 = arith.constant 0 : i32
    return %arg0, %arg2, %c0_i32 : i32, i32, i32
  }
  func.func @transform_2(%arg0: i32, %arg1: i32, %arg2: i32) -> (i32, i32, i32) {
    %c0_i32 = arith.constant 0 : i32
    %c0_i32_0 = arith.constant 0 : i32
    return %arg0, %arg2, %c0_i32 : i32, i32, i32
  }
  func.func @transform_3(%arg0: i32, %arg1: i32, %arg2: i32) -> (i32, i32, i32) {
    %c0_i32 = arith.constant 0 : i32
    %c0_i32_0 = arith.constant 0 : i32
    return %arg0, %arg1, %c0_i32 : i32, i32, i32
  }
}

module attributes {stable_mosaic.version = 11 : i64} {
  func.func @_linear_kernel(%arg0: i32, %arg1: i32, %arg2: i32, %arg3: memref<40x128xbf16, #tpu.memory_space<vmem>>, %arg4: memref<128x128xbf16, #tpu.memory_space<vmem>>, %arg5: memref<1x128xf32, #tpu.memory_space<vmem>>, %arg6: memref<40x128xbf16, #tpu.memory_space<vmem>>, %arg7: memref<40x128xbf16, #tpu.memory_space<vmem>>, %arg8: memref<40x128xf32, #tpu.memory_space<vmem>>) attributes {dimension_semantics = [#tpu.dimension_semantics<parallel>, #tpu.dimension_semantics<parallel>, #tpu.dimension_semantics<arbitrary>], iteration_bounds = array<i64: 1, 1, 1>, scalar_prefetch = 0 : i64, scratch_operands = 1 : i64, tpu.core_type = #tpu.core_type<tc>, window_params = [{transform_indices = @transform_0, window_bounds = array<i64: 40, 128>}, {transform_indices = @transform_1, window_bounds = array<i64: 128, 128>}, {transform_indices = @transform_2, window_bounds = array<i64: 1, 128>}, {transform_indices = @transform_3, window_bounds = array<i64: 40, 128>}, {transform_indices = @transform_4, window_bounds = array<i64: 40, 128>}]} {
    %c0_i32 = arith.constant 0 : i32
    %0 = arith.cmpi eq, %arg2, %c0_i32 : i32
    %1 = arith.extui %0 : i1 to i32
    %c0_i32_0 = arith.constant 0 : i32
    %2 = arith.cmpi ne, %1, %c0_i32_0 : i32
    scf.if %2 {
      %cst_10 = arith.constant 0.000000e+00 : f32
      %12 = vector.broadcast %cst_10 : f32 to vector<40x128xf32>
      %c0_11 = arith.constant 0 : index
      %c0_12 = arith.constant 0 : index
      %13 = vector.load %arg8[%c0_11, %c0_12] : memref<40x128xf32, #tpu.memory_space<vmem>>, vector<40x128xf32>
      tpu.vector_store %arg8[%c0_11, %c0_12], %12 {strides = array<i32>} : memref<40x128xf32, #tpu.memory_space<vmem>>, vector<40x128xf32>,
    } else {
    }
    %c0 = arith.constant 0 : index
    %c0_1 = arith.constant 0 : index
    %3 = vector.load %arg8[%c0, %c0_1] : memref<40x128xf32, #tpu.memory_space<vmem>>, vector<40x128xf32>
    %c0_2 = arith.constant 0 : index
    %c0_3 = arith.constant 0 : index
    %4 = vector.load %arg3[%c0_2, %c0_3] : memref<40x128xbf16, #tpu.memory_space<vmem>>, vector<40x128xbf16>
    %c0_4 = arith.constant 0 : index
    %c0_5 = arith.constant 0 : index
    %5 = vector.load %arg4[%c0_4, %c0_5] : memref<128x128xbf16, #tpu.memory_space<vmem>>, vector<128x128xbf16>
    %cst = arith.constant dense<0.000000e+00> : vector<40x128xf32>
    %6 = tpu.matmul %4, %5, %cst {dimension_numbers = #tpu.dot_dimension_numbers<[1], [0], [0], [1], [0, 0, 1, 1], [], []>} : vector<40x128xbf16>, vector<128x128xbf16>, vector<40x128xf32> -> vector<40x128xf32>
    %7 = arith.addf %3, %6 : vector<40x128xf32>
    %c0_6 = arith.constant 0 : index
    %c0_7 = arith.constant 0 : index
    %8 = vector.load %arg8[%c0_6, %c0_7] : memref<40x128xf32, #tpu.memory_space<vmem>>, vector<40x128xf32>
    tpu.vector_store %arg8[%c0_6, %c0_7], %7 {strides = array<i32>} : memref<40x128xf32, #tpu.memory_space<vmem>>, vector<40x128xf32>,
    %c0_i32_8 = arith.constant 0 : i32
    %9 = arith.cmpi eq, %arg2, %c0_i32_8 : i32
    %10 = arith.extui %9 : i1 to i32
    %c0_i32_9 = arith.constant 0 : i32
    %11 = arith.cmpi ne, %10, %c0_i32_9 : i32
    scf.if %11 {
      %c0_10 = arith.constant 0 : index
      %c0_11 = arith.constant 0 : index
      %12 = vector.load %arg8[%c0_10, %c0_11] : memref<40x128xf32, #tpu.memory_space<vmem>>, vector<40x128xf32>
      %c0_12 = arith.constant 0 : index
      %c0_13 = arith.constant 0 : index
      %13 = vector.load %arg5[%c0_12, %c0_13] : memref<1x128xf32, #tpu.memory_space<vmem>>, vector<1x128xf32>
      %14 = vector.broadcast %13 : vector<1x128xf32> to vector<40x128xf32>
      %15 = arith.addf %12, %14 : vector<40x128xf32>
      %c0_14 = arith.constant 0 : index
      %c0_15 = arith.constant 0 : index
      %16 = vector.load %arg6[%c0_14, %c0_15] : memref<40x128xbf16, #tpu.memory_space<vmem>>, vector<40x128xbf16>
      %17 = arith.extf %16 : vector<40x128xbf16> to vector<40x128xf32>
      %18 = arith.addf %15, %17 : vector<40x128xf32>
      %19 = arith.truncf %18 : vector<40x128xf32> to vector<40x128xbf16>
      %c0_16 = arith.constant 0 : index
      %c0_17 = arith.constant 0 : index
      %20 = vector.load %arg7[%c0_16, %c0_17] : memref<40x128xbf16, #tpu.memory_space<vmem>>, vector<40x128xbf16>
      tpu.vector_store %arg7[%c0_16, %c0_17], %19 {strides = array<i32>} : memref<40x128xbf16, #tpu.memory_space<vmem>>, vector<40x128xbf16>,
    } else {
    }
    return
  }
  func.func @transform_0(%arg0: i32, %arg1: i32, %arg2: i32) -> (i32, i32) {
    %c0_i32 = arith.constant 0 : i32
    return %arg0, %arg2 : i32, i32
  }
  func.func @transform_1(%arg0: i32, %arg1: i32, %arg2: i32) -> (i32, i32) {
    %c0_i32 = arith.constant 0 : i32
    return %arg2, %arg1 : i32, i32
  }
  func.func @transform_2(%arg0: i32, %arg1: i32, %arg2: i32) -> (i32, i32) {
    %c0_i32 = arith.constant 0 : i32
    %c0_i32_0 = arith.constant 0 : i32
    return %c0_i32, %arg1 : i32, i32
  }
  func.func @transform_3(%arg0: i32, %arg1: i32, %arg2: i32) -> (i32, i32) {
    %c0_i32 = arith.constant 0 : i32
    return %arg0, %arg1 : i32, i32
  }
  func.func @transform_4(%arg0: i32, %arg1: i32, %arg2: i32) -> (i32, i32) {
    %c0_i32 = arith.constant 0 : i32
    return %arg0, %arg1 : i32, i32
  }
}

module attributes {stable_mosaic.version = 11 : i64} {
  func.func @_ln_linear_kernel(%arg0: i32, %arg1: i32, %arg2: memref<40x128xbf16, #tpu.memory_space<vmem>>, %arg3: memref<1x128xf32, #tpu.memory_space<vmem>>, %arg4: memref<1x128xf32, #tpu.memory_space<vmem>>, %arg5: memref<128x128xbf16, #tpu.memory_space<vmem>>, %arg6: memref<1x128xf32, #tpu.memory_space<vmem>>, %arg7: memref<40x128xbf16, #tpu.memory_space<vmem>>, %arg8: memref<40x128xbf16, #tpu.memory_space<vmem>>) attributes {dimension_semantics = [#tpu.dimension_semantics<parallel>, #tpu.dimension_semantics<arbitrary>], iteration_bounds = array<i64: 1, 1>, scalar_prefetch = 0 : i64, scratch_operands = 1 : i64, tpu.core_type = #tpu.core_type<tc>, window_params = [{transform_indices = @transform_0, window_bounds = array<i64: 40, 128>}, {pipeline_mode = #tpu.pipeline_mode<synchronous>, transform_indices = @transform_1, window_bounds = array<i64: 1, 128>}, {pipeline_mode = #tpu.pipeline_mode<synchronous>, transform_indices = @transform_2, window_bounds = array<i64: 1, 128>}, {transform_indices = @transform_3, window_bounds = array<i64: 128, 128>}, {transform_indices = @transform_4, window_bounds = array<i64: 1, 128>}, {transform_indices = @transform_5, window_bounds = array<i64: 40, 128>}]} {
    %c0_i32 = arith.constant 0 : i32
    %0 = arith.cmpi eq, %arg1, %c0_i32 : i32
    %1 = arith.extui %0 : i1 to i32
    %c0_i32_0 = arith.constant 0 : i32
    %2 = arith.cmpi ne, %1, %c0_i32_0 : i32
    scf.if %2 {
      %c0_11 = arith.constant 0 : index
      %c0_12 = arith.constant 0 : index
      %19 = vector.load %arg2[%c0_11, %c0_12] : memref<40x128xbf16, #tpu.memory_space<vmem>>, vector<40x128xbf16>
      %20 = arith.extf %19 : vector<40x128xbf16> to vector<40x128xf32>
      %cst_13 = arith.constant dense<0.000000e+00> : vector<40xf32>
      %21 = vector.multi_reduction <add>, %20, %cst_13 [1] : vector<40x128xf32> to vector<40xf32>
      %22 = vector.shape_cast %21 : vector<40xf32> to vector<40x1xf32>
      %cst_14 = arith.constant 3.125000e-02 : f32
      %23 = vector.broadcast %cst_14 : f32 to vector<40x1xf32>
      %24 = arith.mulf %22, %23 : vector<40x1xf32>
      %25 = vector.broadcast %24 : vector<40x1xf32> to vector<40x128xf32>
      %26 = arith.subf %20, %25 : vector<40x128xf32>
      %27 = tpu.iota {dimensions = array<i32: 1>} : vector<40x128xi32>
      %c32_i32 = arith.constant 32 : i32
      %28 = vector.broadcast %c32_i32 : i32 to vector<40x128xi32>
      %29 = arith.cmpi slt, %27, %28 : vector<40x128xi32>
      %cst_15 = arith.constant 0.000000e+00 : f32
      %30 = vector.broadcast %cst_15 : f32 to vector<40x128xf32>
      %31 = arith.select %29, %26, %30 : vector<40x128xi1>, vector<40x128xf32>
      %32 = arith.mulf %31, %31 : vector<40x128xf32>
      %cst_16 = arith.constant dense<0.000000e+00> : vector<40xf32>
      %33 = vector.multi_reduction <add>, %32, %cst_16 [1] : vector<40x128xf32> to vector<40xf32>
      %34 = vector.shape_cast %33 : vector<40xf32> to vector<40x1xf32>
      %cst_17 = arith.constant 3.125000e-02 : f32
      %35 = vector.broadcast %cst_17 : f32 to vector<40x1xf32>
      %36 = arith.mulf %34, %35 : vector<40x1xf32>
      %cst_18 = arith.constant 9.99999974E-6 : f32
      %37 = vector.broadcast %cst_18 : f32 to vector<40x1xf32>
      %38 = arith.addf %36, %37 : vector<40x1xf32>
      %39 = math.rsqrt %38 : vector<40x1xf32>
      %40 = vector.broadcast %39 : vector<40x1xf32> to vector<40x128xf32>
      %41 = arith.mulf %31, %40 : vector<40x128xf32>
      %c0_19 = arith.constant 0 : index
      %c0_20 = arith.constant 0 : index
      %42 = vector.load %arg3[%c0_19, %c0_20] : memref<1x128xf32, #tpu.memory_space<vmem>>, vector<1x128xf32>
      %43 = vector.broadcast %42 : vector<1x128xf32> to vector<40x128xf32>
      %44 = arith.mulf %41, %43 : vector<40x128xf32>
      %c0_21 = arith.constant 0 : index
      %c0_22 = arith.constant 0 : index
      %45 = vector.load %arg4[%c0_21, %c0_22] : memref<1x128xf32, #tpu.memory_space<vmem>>, vector<1x128xf32>
      %46 = vector.broadcast %45 : vector<1x128xf32> to vector<40x128xf32>
      %47 = arith.addf %44, %46 : vector<40x128xf32>
      %48 = arith.truncf %47 : vector<40x128xf32> to vector<40x128xbf16>
      %c0_23 = arith.constant 0 : index
      %c0_24 = arith.constant 0 : index
      %49 = vector.load %arg8[%c0_23, %c0_24] : memref<40x128xbf16, #tpu.memory_space<vmem>>, vector<40x128xbf16>
      tpu.vector_store %arg8[%c0_23, %c0_24], %48 {strides = array<i32>} : memref<40x128xbf16, #tpu.memory_space<vmem>>, vector<40x128xbf16>,
    } else {
    }
    %c0 = arith.constant 0 : index
    %c0_1 = arith.constant 0 : index
    %3 = vector.load %arg8[%c0, %c0_1] : memref<40x128xbf16, #tpu.memory_space<vmem>>, vector<40x128xbf16>
    %c0_2 = arith.constant 0 : index
    %c0_3 = arith.constant 0 : index
    %4 = vector.load %arg5[%c0_2, %c0_3] : memref<128x128xbf16, #tpu.memory_space<vmem>>, vector<128x128xbf16>
    %cst = arith.constant dense<0.000000e+00> : vector<40x128xf32>
    %5 = tpu.matmul %3, %4, %cst {dimension_numbers = #tpu.dot_dimension_numbers<[1], [0], [0], [1], [0, 0, 1, 1], [], []>} : vector<40x128xbf16>, vector<128x128xbf16>, vector<40x128xf32> -> vector<40x128xf32>
    %c0_4 = arith.constant 0 : index
    %c0_5 = arith.constant 0 : index
    %6 = vector.load %arg6[%c0_4, %c0_5] : memref<1x128xf32, #tpu.memory_space<vmem>>, vector<1x128xf32>
    %7 = vector.broadcast %6 : vector<1x128xf32> to vector<40x128xf32>
    %8 = arith.addf %5, %7 : vector<40x128xf32>
    %cst_6 = arith.constant 5.000000e-01 : f32
    %9 = vector.broadcast %cst_6 : f32 to vector<40x128xf32>
    %10 = arith.mulf %9, %8 : vector<40x128xf32>
    %cst_7 = arith.constant 0.707106769 : f32
    %11 = vector.broadcast %cst_7 : f32 to vector<40x128xf32>
    %12 = arith.mulf %8, %11 : vector<40x128xf32>
    %13 = math.erf %12 : vector<40x128xf32>
    %cst_8 = arith.constant 1.000000e+00 : f32
    %14 = vector.broadcast %cst_8 : f32 to vector<40x128xf32>
    %15 = arith.addf %14, %13 : vector<40x128xf32>
    %16 = arith.mulf %10, %15 : vector<40x128xf32>
    %17 = arith.truncf %16 : vector<40x128xf32> to vector<40x128xbf16>
    %c0_9 = arith.constant 0 : index
    %c0_10 = arith.constant 0 : index
    %18 = vector.load %arg7[%c0_9, %c0_10] : memref<40x128xbf16, #tpu.memory_space<vmem>>, vector<40x128xbf16>
    tpu.vector_store %arg7[%c0_9, %c0_10], %17 {strides = array<i32>} : memref<40x128xbf16, #tpu.memory_space<vmem>>, vector<40x128xbf16>,
    return
  }
  func.func @transform_0(%arg0: i32, %arg1: i32) -> (i32, i32) {
    %c0_i32 = arith.constant 0 : i32
    %c0_i32_0 = arith.constant 0 : i32
    return %arg0, %c0_i32 : i32, i32
  }
  func.func @transform_1(%arg0: i32, %arg1: i32) -> (i32, i32) {
    %c0_i32 = arith.constant 0 : i32
    %c0_i32_0 = arith.constant 0 : i32
    %c0_i32_1 = arith.constant 0 : i32
    return %c0_i32, %c0_i32_0 : i32, i32
  }
  func.func @transform_2(%arg0: i32, %arg1: i32) -> (i32, i32) {
    %c0_i32 = arith.constant 0 : i32
    %c0_i32_0 = arith.constant 0 : i32
    %c0_i32_1 = arith.constant 0 : i32
    return %c0_i32, %c0_i32_0 : i32, i32
  }
  func.func @transform_3(%arg0: i32, %arg1: i32) -> (i32, i32) {
    %c0_i32 = arith.constant 0 : i32
    %c0_i32_0 = arith.constant 0 : i32
    return %c0_i32, %arg1 : i32, i32
  }
  func.func @transform_4(%arg0: i32, %arg1: i32) -> (i32, i32) {
    %c0_i32 = arith.constant 0 : i32
    %c0_i32_0 = arith.constant 0 : i32
    return %c0_i32, %arg1 : i32, i32
  }
  func.func @transform_5(%arg0: i32, %arg1: i32) -> (i32, i32) {
    %c0_i32 = arith.constant 0 : i32
    return %arg0, %arg1 : i32, i32
  }
}

module attributes {stable_mosaic.version = 11 : i64} {
  func.func @_ln_linear_kernel(%arg0: i32, %arg1: i32, %arg2: memref<8x128xbf16, #tpu.memory_space<vmem>>, %arg3: memref<1x128xf32, #tpu.memory_space<vmem>>, %arg4: memref<1x128xf32, #tpu.memory_space<vmem>>, %arg5: memref<128x128xbf16, #tpu.memory_space<vmem>>, %arg6: memref<1x128xf32, #tpu.memory_space<vmem>>, %arg7: memref<8x128xf32, #tpu.memory_space<vmem>>, %arg8: memref<8x128xbf16, #tpu.memory_space<vmem>>) attributes {dimension_semantics = [#tpu.dimension_semantics<parallel>, #tpu.dimension_semantics<arbitrary>], iteration_bounds = array<i64: 1, 1>, scalar_prefetch = 0 : i64, scratch_operands = 1 : i64, tpu.core_type = #tpu.core_type<tc>, window_params = [{transform_indices = @transform_0, window_bounds = array<i64: 8, 128>}, {pipeline_mode = #tpu.pipeline_mode<synchronous>, transform_indices = @transform_1, window_bounds = array<i64: 1, 128>}, {pipeline_mode = #tpu.pipeline_mode<synchronous>, transform_indices = @transform_2, window_bounds = array<i64: 1, 128>}, {transform_indices = @transform_3, window_bounds = array<i64: 128, 128>}, {transform_indices = @transform_4, window_bounds = array<i64: 1, 128>}, {transform_indices = @transform_5, window_bounds = array<i64: 8, 128>}]} {
    %c0_i32 = arith.constant 0 : i32
    %0 = arith.cmpi eq, %arg1, %c0_i32 : i32
    %1 = arith.extui %0 : i1 to i32
    %c0_i32_0 = arith.constant 0 : i32
    %2 = arith.cmpi ne, %1, %c0_i32_0 : i32
    scf.if %2 {
      %c0_8 = arith.constant 0 : index
      %c0_9 = arith.constant 0 : index
      %10 = vector.load %arg2[%c0_8, %c0_9] : memref<8x128xbf16, #tpu.memory_space<vmem>>, vector<8x128xbf16>
      %11 = arith.extf %10 : vector<8x128xbf16> to vector<8x128xf32>
      %cst_10 = arith.constant dense<0.000000e+00> : vector<8xf32>
      %12 = vector.multi_reduction <add>, %11, %cst_10 [1] : vector<8x128xf32> to vector<8xf32>
      %13 = vector.shape_cast %12 : vector<8xf32> to vector<8x1xf32>
      %cst_11 = arith.constant 3.125000e-02 : f32
      %14 = vector.broadcast %cst_11 : f32 to vector<8x1xf32>
      %15 = arith.mulf %13, %14 : vector<8x1xf32>
      %16 = vector.broadcast %15 : vector<8x1xf32> to vector<8x128xf32>
      %17 = arith.subf %11, %16 : vector<8x128xf32>
      %18 = tpu.iota {dimensions = array<i32: 1>} : vector<8x128xi32>
      %c32_i32 = arith.constant 32 : i32
      %19 = vector.broadcast %c32_i32 : i32 to vector<8x128xi32>
      %20 = arith.cmpi slt, %18, %19 : vector<8x128xi32>
      %cst_12 = arith.constant 0.000000e+00 : f32
      %21 = vector.broadcast %cst_12 : f32 to vector<8x128xf32>
      %22 = arith.select %20, %17, %21 : vector<8x128xi1>, vector<8x128xf32>
      %23 = arith.mulf %22, %22 : vector<8x128xf32>
      %cst_13 = arith.constant dense<0.000000e+00> : vector<8xf32>
      %24 = vector.multi_reduction <add>, %23, %cst_13 [1] : vector<8x128xf32> to vector<8xf32>
      %25 = vector.shape_cast %24 : vector<8xf32> to vector<8x1xf32>
      %cst_14 = arith.constant 3.125000e-02 : f32
      %26 = vector.broadcast %cst_14 : f32 to vector<8x1xf32>
      %27 = arith.mulf %25, %26 : vector<8x1xf32>
      %cst_15 = arith.constant 9.99999974E-6 : f32
      %28 = vector.broadcast %cst_15 : f32 to vector<8x1xf32>
      %29 = arith.addf %27, %28 : vector<8x1xf32>
      %30 = math.rsqrt %29 : vector<8x1xf32>
      %31 = vector.broadcast %30 : vector<8x1xf32> to vector<8x128xf32>
      %32 = arith.mulf %22, %31 : vector<8x128xf32>
      %c0_16 = arith.constant 0 : index
      %c0_17 = arith.constant 0 : index
      %33 = vector.load %arg3[%c0_16, %c0_17] : memref<1x128xf32, #tpu.memory_space<vmem>>, vector<1x128xf32>
      %34 = vector.broadcast %33 : vector<1x128xf32> to vector<8x128xf32>
      %35 = arith.mulf %32, %34 : vector<8x128xf32>
      %c0_18 = arith.constant 0 : index
      %c0_19 = arith.constant 0 : index
      %36 = vector.load %arg4[%c0_18, %c0_19] : memref<1x128xf32, #tpu.memory_space<vmem>>, vector<1x128xf32>
      %37 = vector.broadcast %36 : vector<1x128xf32> to vector<8x128xf32>
      %38 = arith.addf %35, %37 : vector<8x128xf32>
      %39 = arith.truncf %38 : vector<8x128xf32> to vector<8x128xbf16>
      %c0_20 = arith.constant 0 : index
      %c0_21 = arith.constant 0 : index
      %40 = vector.load %arg8[%c0_20, %c0_21] : memref<8x128xbf16, #tpu.memory_space<vmem>>, vector<8x128xbf16>
      tpu.vector_store %arg8[%c0_20, %c0_21], %39 {strides = array<i32>} : memref<8x128xbf16, #tpu.memory_space<vmem>>, vector<8x128xbf16>,
    } else {
    }
    %c0 = arith.constant 0 : index
    %c0_1 = arith.constant 0 : index
    %3 = vector.load %arg8[%c0, %c0_1] : memref<8x128xbf16, #tpu.memory_space<vmem>>, vector<8x128xbf16>
    %c0_2 = arith.constant 0 : index
    %c0_3 = arith.constant 0 : index
    %4 = vector.load %arg5[%c0_2, %c0_3] : memref<128x128xbf16, #tpu.memory_space<vmem>>, vector<128x128xbf16>
    %cst = arith.constant dense<0.000000e+00> : vector<8x128xf32>
    %5 = tpu.matmul %3, %4, %cst {dimension_numbers = #tpu.dot_dimension_numbers<[1], [0], [0], [1], [0, 0, 1, 1], [], []>} : vector<8x128xbf16>, vector<128x128xbf16>, vector<8x128xf32> -> vector<8x128xf32>
    %c0_4 = arith.constant 0 : index
    %c0_5 = arith.constant 0 : index
    %6 = vector.load %arg6[%c0_4, %c0_5] : memref<1x128xf32, #tpu.memory_space<vmem>>, vector<1x128xf32>
    %7 = vector.broadcast %6 : vector<1x128xf32> to vector<8x128xf32>
    %8 = arith.addf %5, %7 : vector<8x128xf32>
    %c0_6 = arith.constant 0 : index
    %c0_7 = arith.constant 0 : index
    %9 = vector.load %arg7[%c0_6, %c0_7] : memref<8x128xf32, #tpu.memory_space<vmem>>, vector<8x128xf32>
    tpu.vector_store %arg7[%c0_6, %c0_7], %8 {strides = array<i32>} : memref<8x128xf32, #tpu.memory_space<vmem>>, vector<8x128xf32>,
    return
  }
  func.func @transform_0(%arg0: i32, %arg1: i32) -> (i32, i32) {
    %c0_i32 = arith.constant 0 : i32
    %c0_i32_0 = arith.constant 0 : i32
    return %arg0, %c0_i32 : i32, i32
  }
  func.func @transform_1(%arg0: i32, %arg1: i32) -> (i32, i32) {
    %c0_i32 = arith.constant 0 : i32
    %c0_i32_0 = arith.constant 0 : i32
    %c0_i32_1 = arith.constant 0 : i32
    return %c0_i32, %c0_i32_0 : i32, i32
  }
  func.func @transform_2(%arg0: i32, %arg1: i32) -> (i32, i32) {
    %c0_i32 = arith.constant 0 : i32
    %c0_i32_0 = arith.constant 0 : i32
    %c0_i32_1 = arith.constant 0 : i32
    return %c0_i32, %c0_i32_0 : i32, i32
  }
  func.func @transform_3(%arg0: i32, %arg1: i32) -> (i32, i32) {
    %c0_i32 = arith.constant 0 : i32
    %c0_i32_0 = arith.constant 0 : i32
    return %c0_i32, %arg1 : i32, i32
  }
  func.func @transform_4(%arg0: i32, %arg1: i32) -> (i32, i32) {
    %c0_i32 = arith.constant 0 : i32
    %c0_i32_0 = arith.constant 0 : i32
    return %c0_i32, %arg1 : i32, i32
  }
  func.func @transform_5(%arg0: i32, %arg1: i32) -> (i32, i32) {
    %c0_i32 = arith.constant 0 : i32
    return %arg0, %arg1 : i32, i32
  }
}

</mosaic_0001>

<llo_original>
// kernel: mae_linear_probing_forward.13
$region0: #{mae_linear_probing_forward.13}
  #allocation0 [shape = 'u32[]', space=smem, size = 0x4, offset = 0x4, fixed_abs, tag = 'smem constant byte address 0x4 - core index']
  #allocation1 [shape = 'u32[144,128]{1,0:T(1,128)}', space=vmem, size = 0x12000, scoped, tag = 'internal scratch']
  #allocation2 [shape = 'bf16[40,128]{1,0:T(8,128)(2,1)}', space=vmem, size = 0x2800, scoped, tag = 'scratch operand']
  %s0 = inlined_call_operand.vmem [shape: bf16[40,128], index: 0, kind: input, shape index: {}]
  %s1 = inlined_call_operand.vmem [shape: f32[1,128], index: 1, kind: input, shape index: {}]
  %s2 = inlined_call_operand.vmem [shape: f32[1,128], index: 2, kind: input, shape index: {}]
  %s3 = inlined_call_operand.vmem [shape: bf16[128,128], index: 3, kind: input, shape index: {}]
  %s4 = inlined_call_operand.vmem [shape: f32[1,128], index: 4, kind: input, shape index: {}]
  %s5 = inlined_call_operand.vmem [shape: bf16[40,128], index: 5, kind: output, shape index: {}]
  %s6 = sld [smem:[#allocation0]]
  $region34: #{mae_linear_probing_forward.13} parent=0
    _
  %s8 = ssub.s32 1, %s6
  %s9 = scalar_select 0, %s8, %s6
  // Predicated region
  $region2: #{mae_linear_probing_forward.13} parent=0 // pred_check
    _
  $region3: #{mae_linear_probing_forward.13} parent=0 // pred_check_branch
    %11 = sbr.rel (0) target = $region5
  $region4: #{mae_linear_probing_forward.13} parent=0 // pred_region
    _
  $region5: #{mae_linear_probing_forward.13} parent=0 // pred_fallthru
    _
  // Predicated region
  $region6: #{mae_linear_probing_forward.13} parent=0 // pred_check
    _
  $region7: #{mae_linear_probing_forward.13} parent=0 // pred_check_branch
    %13 = sbr.rel (0) target = $region9
  $region8: #{mae_linear_probing_forward.13} parent=0 // pred_region
    _
  $region9: #{mae_linear_probing_forward.13} parent=0 // pred_fallthru
    _
  // Predicated region
  $region10: #{mae_linear_probing_forward.13} parent=0 // pred_check
    _
  $region11: #{mae_linear_probing_forward.13} parent=0 // pred_check_branch
    %15 = sbr.rel (0) target = $region13
  $region12: #{mae_linear_probing_forward.13} parent=0 // pred_region
    _
  $region13: #{mae_linear_probing_forward.13} parent=0 // pred_fallthru
    _
  // Predicated region
  $region14: #{mae_linear_probing_forward.13} parent=0 // pred_check
    _
  $region15: #{mae_linear_probing_forward.13} parent=0 // pred_check_branch
    %17 = sbr.rel (0) target = $region17
  $region16: #{mae_linear_probing_forward.13} parent=0 // pred_region
    _
  $region17: #{mae_linear_probing_forward.13} parent=0 // pred_fallthru
    _
  // Predicated region
  $region18: #{mae_linear_probing_forward.13} parent=0 // pred_check
    _
  $region19: #{mae_linear_probing_forward.13} parent=0 // pred_check_branch
    %19 = sbr.rel (0) target = $region21
  $region20: #{mae_linear_probing_forward.13} parent=0 // pred_region
    _
  $region21: #{mae_linear_probing_forward.13} parent=0 // pred_fallthru
    _
  %p21 = scmp.eq.s32.totalorder 0, 0
  // Predicated region
  $region22: #{mae_linear_probing_forward.13} parent=0 // pred_check
    %p22 = pneg %p21
  $region23: #{mae_linear_probing_forward.13} parent=0 // pred_check_branch
    %24 = sbr.rel (%p22) target = $region25
  $region24: #{mae_linear_probing_forward.13} parent=0 // pred_region
    %v25 = vld [vmem:[%s0] sm:$0xf]
    %v26 = vld [vmem:[%s0 + $0x4] sm:$0xf]
    %v27 = vld [vmem:[%s0 + $0x8] sm:$0xf]
    %v28 = vld [vmem:[%s0 + $0xc] sm:$0xf]
    %v29 = vld [vmem:[%s0 + $0x10] sm:$0xf]
    %v30 = vunpack.c.l.bf16 %v25
    %v31 = vunpack.c.l.bf16 %v26
    %v32 = vunpack.c.l.bf16 %v27
    %v33 = vunpack.c.l.bf16 %v28
    %v34 = vunpack.c.l.bf16 %v29
    %35 = vadd.xlane.f32.xlu0 %v30
    %v36 = vpop.xlane.xlu0 %35
    %37 = vadd.xlane.f32.xlu0 %v31
    %v38 = vpop.xlane.xlu0 %37
    %39 = vadd.xlane.f32.xlu0 %v32
    %v40 = vpop.xlane.xlu0 %39
    %41 = vadd.xlane.f32.xlu0 %v33
    %v42 = vpop.xlane.xlu0 %41
    %43 = vadd.xlane.f32.xlu0 %v34
    %v44 = vpop.xlane.xlu0 %43
    %v45 = vmul.f32 %v36, 0.03125
    %v46 = vmul.f32 %v38, 0.03125
    %v47 = vmul.f32 %v40, 0.03125
    %v48 = vmul.f32 %v42, 0.03125
    %v49 = vmul.f32 %v44, 0.03125
    %v50 = vsub.f32 %v30, %v45
    %v51 = vsub.f32 %v31, %v46
    %v52 = vsub.f32 %v32, %v47
    %v53 = vsub.f32 %v33, %v48
    %v54 = vsub.f32 %v34, %v49
    %v55 = vlaneseq
    %v56 = vand.u32 %v55, 127
    %vm57 = vcmp.lt.s32.totalorder %v56, 32
    %v58 = vsel %vm57, %v50, 0.0
    %v59 = vsel %vm57, %v51, 0.0
    %v60 = vsel %vm57, %v52, 0.0
    %v61 = vsel %vm57, %v53, 0.0
    %v62 = vsel %vm57, %v54, 0.0
    %v63 = vmul.f32 %v58, %v58
    %v64 = vmul.f32 %v59, %v59
    %v65 = vmul.f32 %v60, %v60
    %v66 = vmul.f32 %v61, %v61
    %v67 = vmul.f32 %v62, %v62
    %68 = vadd.xlane.f32.xlu0 %v63
    %v69 = vpop.xlane.xlu0 %68
    %70 = vadd.xlane.f32.xlu0 %v64
    %v71 = vpop.xlane.xlu0 %70
    %72 = vadd.xlane.f32.xlu0 %v65
    %v73 = vpop.xlane.xlu0 %72
    %74 = vadd.xlane.f32.xlu0 %v66
    %v75 = vpop.xlane.xlu0 %74
    %76 = vadd.xlane.f32.xlu0 %v67
    %v77 = vpop.xlane.xlu0 %76
    %v78 = vmul.f32 %v69, 0.03125
    %v79 = vmul.f32 %v71, 0.03125
    %v80 = vmul.f32 %v73, 0.03125
    %v81 = vmul.f32 %v75, 0.03125
    %v82 = vmul.f32 %v77, 0.03125
    %v83 = vadd.f32 %v78, 1e-05
    %v84 = vadd.f32 %v79, 1e-05
    %v85 = vadd.f32 %v80, 1e-05
    %v86 = vadd.f32 %v81, 1e-05
    %v87 = vadd.f32 %v82, 1e-05
    %v88 = vrsqrt.pop %v83
    %v89 = vrsqrt.pop %v84
    %v90 = vrsqrt.pop %v85
    %v91 = vrsqrt.pop %v86
    %v92 = vrsqrt.pop %v87
    %v93 = vmul.f32 %v58, %v88
    %v94 = vmul.f32 %v59, %v89
    %v95 = vmul.f32 %v60, %v90
    %v96 = vmul.f32 %v61, %v91
    %v97 = vmul.f32 %v62, %v92
    %v98 = vld [vmem:[%s1] sm:$0x1]
    %v100 = vlaneseq
    %v101 = vshrl.u32 %v100, 7
    %v102 = vsub.s32 0, %v101
    %v103 = vrot.slane %v98, %v102
    %v105 = vmul.f32 %v93, %v103
    %v106 = vmul.f32 %v94, %v103
    %v107 = vmul.f32 %v95, %v103
    %v108 = vmul.f32 %v96, %v103
    %v109 = vmul.f32 %v97, %v103
    %v110 = vld [vmem:[%s2] sm:$0x1]
    %v112 = vlaneseq
    %v113 = vshrl.u32 %v112, 7
    %v114 = vsub.s32 0, %v113
    %v115 = vrot.slane %v110, %v114
    %v117 = vadd.f32 %v105, %v115
    %v118 = vadd.f32 %v106, %v115
    %v119 = vadd.f32 %v107, %v115
    %v120 = vadd.f32 %v108, %v115
    %v121 = vadd.f32 %v109, %v115
    %v122 = vpack.c.bf16 %v118, %v117
    %v123 = vpack.c.bf16 %v120, %v119
    %v124 = vpack.c.bf16 %v121, %v121
    %v128 = vunpack.c.l.b16 %v122
    %v129 = vunpack.c.h.b16 %v122
    %v130 = vunpack.c.l.b16 %v123
    %v131 = vunpack.c.h.b16 %v123
    %v132 = vunpack.c.l.b16 %v124
    %v133 = vpack.c.b16 %v128, %v128
    %v134 = vpack.c.b16 %v129, %v129
    %v135 = vpack.c.b16 %v130, %v130
    %v136 = vpack.c.b16 %v131, %v131
    %v137 = vpack.c.b16 %v132, %v132
    %143 = vst [vmem:[#allocation2] sm:$0xf] %v133
    %144 = vst [vmem:[#allocation2 + $0x4] sm:$0xf] %v134
    %145 = vst [vmem:[#allocation2 + $0x8] sm:$0xf] %v135
    %146 = vst [vmem:[#allocation2 + $0xc] sm:$0xf] %v136
    %147 = vst [vmem:[#allocation2 + $0x10] sm:$0xf] %v137
  $region25: #{mae_linear_probing_forward.13} parent=0 // pred_fallthru
    _
  %v148 = vld [vmem:[#allocation2] sm:$0xf]
  %v149 = vld [vmem:[#allocation2 + $0x4] sm:$0xf]
  %v150 = vld [vmem:[#allocation2 + $0x8] sm:$0xf]
  %v151 = vld [vmem:[#allocation2 + $0xc] sm:$0xf]
  %v152 = vld [vmem:[#allocation2 + $0x10] sm:$0xf]
  %v153 = vld [vmem:[%s3] sm:$0xf]
  %v154 = vld [vmem:[%s3 + $0x4] sm:$0xf]
  %v155 = vld [vmem:[%s3 + $0x8] sm:$0xf]
  %v156 = vld [vmem:[%s3 + $0xc] sm:$0xf]
  %v157 = vld [vmem:[%s3 + $0x10] sm:$0xf]
  %v158 = vld [vmem:[%s3 + $0x14] sm:$0xf]
  %v159 = vld [vmem:[%s3 + $0x18] sm:$0xf]
  %v160 = vld [vmem:[%s3 + $0x1c] sm:$0xf]
  %v161 = vld [vmem:[%s3 + $0x20] sm:$0xf]
  %v162 = vld [vmem:[%s3 + $0x24] sm:$0xf]
  %v163 = vld [vmem:[%s3 + $0x28] sm:$0xf]
  %v164 = vld [vmem:[%s3 + $0x2c] sm:$0xf]
  %v165 = vld [vmem:[%s3 + $0x30] sm:$0xf]
  %v166 = vld [vmem:[%s3 + $0x34] sm:$0xf]
  %v167 = vld [vmem:[%s3 + $0x38] sm:$0xf]
  %v168 = vld [vmem:[%s3 + $0x3c] sm:$0xf]
  %v169 = vld [vmem:[%s4] sm:$0x1]
  %v171 = vlaneseq
  %v172 = vshrl.u32 %v171, 7
  %v173 = vsub.s32 0, %v172
  %v174 = vrot.slane %v169, %v173
  %v181 = vunpack.c.l.b16 %v148
  %v182 = vunpack.c.l.b16 %v149
  %v183 = vunpack.c.l.b16 %v150
  %v184 = vunpack.c.l.b16 %v151
  %v185 = vunpack.c.l.b16 %v152
  %v186 = vpack.c.b16 %v182, %v181
  %v187 = vpack.c.b16 %v184, %v183
  %v188 = vpack.c.b16 %v185, %v185
  %v208 = vunpack.c.l.b16 %v153
  %v209 = vunpack.c.l.b16 %v154
  %v210 = vunpack.c.l.b16 %v155
  %v211 = vunpack.c.l.b16 %v156
  %v212 = vunpack.c.l.b16 %v157
  %v213 = vunpack.c.l.b16 %v158
  %v214 = vunpack.c.l.b16 %v159
  %v215 = vunpack.c.l.b16 %v160
  %v216 = vunpack.c.l.b16 %v161
  %v217 = vunpack.c.l.b16 %v162
  %v218 = vunpack.c.l.b16 %v163
  %v219 = vunpack.c.l.b16 %v164
  %v220 = vunpack.c.l.b16 %v165
  %v221 = vunpack.c.l.b16 %v166
  %v222 = vunpack.c.l.b16 %v167
  %v223 = vunpack.c.l.b16 %v168
  %v224 = vpack.c.b16 %v209, %v208
  %v225 = vpack.c.b16 %v211, %v210
  %v226 = vpack.c.b16 %v213, %v212
  %v227 = vpack.c.b16 %v215, %v214
  %v228 = vpack.c.b16 %v217, %v216
  %v229 = vpack.c.b16 %v219, %v218
  %v230 = vpack.c.b16 %v221, %v220
  %v231 = vpack.c.b16 %v223, %v222
  %240 = vmatprep.subr.bf16.mxu0 0
  %241 = vmatpush1.bf16.msra.mxu0 %v224
  %242 = vmatprep.subr.bf16.mxu0 0
  %243 = vmatpush1.bf16.msra.mxu0 %v225
  %244 = vmatprep.subr.bf16.mxu0 0
  %245 = vmatpush1.bf16.msra.mxu0 %v226
  %246 = vmatprep.subr.bf16.mxu0 0
  %247 = vmatpush1.bf16.msra.mxu0 %v227
  %248 = vmatprep.subr.bf16.mxu0 0
  %249 = vmatpush1.bf16.msra.mxu0 %v228
  %250 = vmatprep.subr.bf16.mxu0 0
  %251 = vmatpush1.bf16.msra.mxu0 %v229
  %252 = vmatprep.subr.bf16.mxu0 0
  %253 = vmatpush1.bf16.msra.mxu0 %v230
  %254 = vmatprep.subr.bf16.mxu0 0
  %255 = vmatpush1.bf16.msra.mxu0 %v231
  %256 = vmatprep.subr.bf16.mxu0 0
  %257 = vmatpush1.bf16.msra.mxu0 0
  %258 = vmatprep.subr.bf16.mxu0 0
  %259 = vmatpush1.bf16.msra.mxu0 0
  %260 = vmatprep.subr.bf16.mxu0 0
  %261 = vmatpush1.bf16.msra.mxu0 0
  %262 = vmatprep.subr.bf16.mxu0 0
  %263 = vmatpush1.bf16.msra.mxu0 0
  %264 = vmatprep.subr.bf16.mxu0 0
  %265 = vmatpush1.bf16.msra.mxu0 0
  %266 = vmatprep.subr.bf16.mxu0 0
  %267 = vmatpush1.bf16.msra.mxu0 0
  %268 = vmatprep.subr.bf16.mxu0 0
  %269 = vmatpush1.bf16.msra.mxu0 0
  %270 = vmatprep.subr.bf16.mxu0 0
  %271 = vmatpush1.bf16.msra.mxu0 0
  %272 = vmatprep.mubr.bf16.mxu0 0
  %273 = vmatmul.mubr.bf16.gmra.mrb[0].mxu0 %v186
  %v274 = vpop.f32.mrb[0].mxu0
  %v275 = vadd.f32 %v174, %v274
  %v276 = vpop.f32.mrb[0].mxu0
  %v277 = vpop.f32.mrb[0].mxu0
  %v278 = vadd.f32 %v174, %v277
  %v279 = vpop.f32.mrb[0].mxu0
  %280 = vmatprep.mubr.bf16.mxu0 0
  %281 = vmatmul.mubr.bf16.gmra.mrb[0].mxu0 %v187
  %v282 = vpop.f32.mrb[0].mxu0
  %v283 = vadd.f32 %v174, %v282
  %v284 = vpop.f32.mrb[0].mxu0
  %v285 = vpop.f32.mrb[0].mxu0
  %v286 = vadd.f32 %v174, %v285
  %v287 = vpop.f32.mrb[0].mxu0
  %288 = vmatprep.mubr.bf16.mxu0 0
  %289 = vmatmul.mubr.bf16.gmra.mrb[0].mxu0 %v188
  %v290 = vpop.f32.mrb[0].mxu0
  %v291 = vadd.f32 %v174, %v290
  %v292 = vpop.f32.mrb[0].mxu0
  %v293 = vpop.f32.mrb[0].mxu0
  %v294 = vpop.f32.mrb[0].mxu0
  %295 = vdwg.mxu0
  %v296 = vpack.c.bf16 %v278, %v275
  %v297 = vpack.c.bf16 %v286, %v283
  %v298 = vpack.c.bf16 %v291, %v291
  %v302 = vunpack.c.l.b16 %v296
  %v303 = vunpack.c.h.b16 %v296
  %v304 = vunpack.c.l.b16 %v297
  %v305 = vunpack.c.h.b16 %v297
  %v306 = vunpack.c.l.b16 %v298
  %v307 = vpack.c.b16 %v302, %v302
  %v308 = vpack.c.b16 %v303, %v303
  %v309 = vpack.c.b16 %v304, %v304
  %v310 = vpack.c.b16 %v305, %v305
  %v311 = vpack.c.b16 %v306, %v306
  %317 = vst [vmem:[%s5] sm:$0xf] %v307
  %318 = vst [vmem:[%s5 + $0x4] sm:$0xf] %v308
  %319 = vst [vmem:[%s5 + $0x8] sm:$0xf] %v309
  %320 = vst [vmem:[%s5 + $0xc] sm:$0xf] %v310
  %321 = vst [vmem:[%s5 + $0x10] sm:$0xf] %v311
  // Predicated region
  $region26: #{mae_linear_probing_forward.13} parent=0 // pred_check
    _
  $region27: #{mae_linear_probing_forward.13} parent=0 // pred_check_branch
    %323 = sbr.rel (0) target = $region29
  $region28: #{mae_linear_probing_forward.13} parent=0 // pred_region
    _
  $region29: #{mae_linear_probing_forward.13} parent=0 // pred_fallthru
    _
  // Predicated region
  $region30: #{mae_linear_probing_forward.13} parent=0 // pred_check
    _
  $region31: #{mae_linear_probing_forward.13} parent=0 // pred_check_branch
    %325 = sbr.rel (0) target = $region33
  $region32: #{mae_linear_probing_forward.13} parent=0 // pred_region
    _
  $region33: #{mae_linear_probing_forward.13} parent=0 // pred_fallthru
    _

// kernel: mae_linear_probing_forward.12
$region0: #{mae_linear_probing_forward.12}
  #allocation0 [shape = 'u32[]', space=smem, size = 0x4, offset = 0x4, fixed_abs, tag = 'smem constant byte address 0x4 - core index']
  #allocation1 [shape = 'u32[144,128]{1,0:T(1,128)}', space=vmem, size = 0x12000, scoped, tag = 'internal scratch']
  #allocation2 [shape = 'f32[32,128]{1,0:T(8,128)}', space=vmem, size = 0x4000, scoped, tag = 'scratch operand']
  %s0 = inlined_call_operand.vmem [shape: bf16[32,128], index: 0, kind: input, shape index: {}]
  %s1 = inlined_call_operand.vmem [shape: bf16[128,128], index: 1, kind: input, shape index: {}]
  %s2 = inlined_call_operand.vmem [shape: f32[1,128], index: 2, kind: input, shape index: {}]
  %s3 = inlined_call_operand.vmem [shape: bf16[32,128], index: 3, kind: output, shape index: {}]
  %s4 = sld [smem:[#allocation0]]
  $region30: #{mae_linear_probing_forward.12} parent=0
    _
  %s6 = ssub.s32 1, %s4
  %s7 = scalar_select 0, %s6, %s4
  // Predicated region
  $region2: #{mae_linear_probing_forward.12} parent=0 // pred_check
    _
  $region3: #{mae_linear_probing_forward.12} parent=0 // pred_check_branch
    %9 = sbr.rel (0) target = $region5
  $region4: #{mae_linear_probing_forward.12} parent=0 // pred_region
    _
  $region5: #{mae_linear_probing_forward.12} parent=0 // pred_fallthru
    _
  // Predicated region
  $region6: #{mae_linear_probing_forward.12} parent=0 // pred_check
    _
  $region7: #{mae_linear_probing_forward.12} parent=0 // pred_check_branch
    %11 = sbr.rel (0) target = $region9
  $region8: #{mae_linear_probing_forward.12} parent=0 // pred_region
    _
  $region9: #{mae_linear_probing_forward.12} parent=0 // pred_fallthru
    _
  // Predicated region
  $region10: #{mae_linear_probing_forward.12} parent=0 // pred_check
    _
  $region11: #{mae_linear_probing_forward.12} parent=0 // pred_check_branch
    %13 = sbr.rel (0) target = $region13
  $region12: #{mae_linear_probing_forward.12} parent=0 // pred_region
    _
  $region13: #{mae_linear_probing_forward.12} parent=0 // pred_fallthru
    _
  %p15 = scmp.eq.s32.totalorder 0, 0
  // Predicated region
  $region14: #{mae_linear_probing_forward.12} parent=0 // pred_check
    %p16 = pneg %p15
  $region15: #{mae_linear_probing_forward.12} parent=0 // pred_check_branch
    %18 = sbr.rel (%p16) target = $region17
  $region16: #{mae_linear_probing_forward.12} parent=0 // pred_region
    %19 = vst [vmem:[#allocation2] sm:$0xff] 0.0
    %20 = vst [vmem:[#allocation2 + $0x8] sm:$0xff] 0.0
    %21 = vst [vmem:[#allocation2 + $0x10] sm:$0xff] 0.0
    %22 = vst [vmem:[#allocation2 + $0x18] sm:$0xff] 0.0
  $region17: #{mae_linear_probing_forward.12} parent=0 // pred_fallthru
    _
  %v23 = vld [vmem:[#allocation2] sm:$0xff]
  %v24 = vld [vmem:[#allocation2 + $0x8] sm:$0xff]
  %v25 = vld [vmem:[#allocation2 + $0x10] sm:$0xff]
  %v26 = vld [vmem:[#allocation2 + $0x18] sm:$0xff]
  %v27 = vld [vmem:[%s0] sm:$0xf]
  %v28 = vld [vmem:[%s0 + $0x4] sm:$0xf]
  %v29 = vld [vmem:[%s0 + $0x8] sm:$0xf]
  %v30 = vld [vmem:[%s0 + $0xc] sm:$0xf]
  %v31 = vld [vmem:[%s1] sm:$0xf]
  %v32 = vld [vmem:[%s1 + $0x4] sm:$0xf]
  %v33 = vld [vmem:[%s1 + $0x8] sm:$0xf]
  %v34 = vld [vmem:[%s1 + $0xc] sm:$0xf]
  %v35 = vld [vmem:[%s1 + $0x10] sm:$0xf]
  %v36 = vld [vmem:[%s1 + $0x14] sm:$0xf]
  %v37 = vld [vmem:[%s1 + $0x18] sm:$0xf]
  %v38 = vld [vmem:[%s1 + $0x1c] sm:$0xf]
  %v39 = vld [vmem:[%s1 + $0x20] sm:$0xf]
  %v40 = vld [vmem:[%s1 + $0x24] sm:$0xf]
  %v41 = vld [vmem:[%s1 + $0x28] sm:$0xf]
  %v42 = vld [vmem:[%s1 + $0x2c] sm:$0xf]
  %v43 = vld [vmem:[%s1 + $0x30] sm:$0xf]
  %v44 = vld [vmem:[%s1 + $0x34] sm:$0xf]
  %v45 = vld [vmem:[%s1 + $0x38] sm:$0xf]
  %v46 = vld [vmem:[%s1 + $0x3c] sm:$0xf]
  %v51 = vunpack.c.l.b16 %v27
  %v52 = vunpack.c.l.b16 %v28
  %v53 = vunpack.c.l.b16 %v29
  %v54 = vunpack.c.l.b16 %v30
  %v55 = vpack.c.b16 %v52, %v51
  %v56 = vpack.c.b16 %v54, %v53
  %v75 = vunpack.c.l.b16 %v31
  %v76 = vunpack.c.l.b16 %v32
  %v77 = vunpack.c.l.b16 %v33
  %v78 = vunpack.c.l.b16 %v34
  %v79 = vunpack.c.l.b16 %v35
  %v80 = vunpack.c.l.b16 %v36
  %v81 = vunpack.c.l.b16 %v37
  %v82 = vunpack.c.l.b16 %v38
  %v83 = vunpack.c.l.b16 %v39
  %v84 = vunpack.c.l.b16 %v40
  %v85 = vunpack.c.l.b16 %v41
  %v86 = vunpack.c.l.b16 %v42
  %v87 = vunpack.c.l.b16 %v43
  %v88 = vunpack.c.l.b16 %v44
  %v89 = vunpack.c.l.b16 %v45
  %v90 = vunpack.c.l.b16 %v46
  %v91 = vpack.c.b16 %v76, %v75
  %v92 = vpack.c.b16 %v78, %v77
  %v93 = vpack.c.b16 %v80, %v79
  %v94 = vpack.c.b16 %v82, %v81
  %v95 = vpack.c.b16 %v84, %v83
  %v96 = vpack.c.b16 %v86, %v85
  %v97 = vpack.c.b16 %v88, %v87
  %v98 = vpack.c.b16 %v90, %v89
  %107 = vmatprep.subr.bf16.mxu0 0
  %108 = vmatpush1.bf16.msra.mxu0 %v91
  %109 = vmatprep.subr.bf16.mxu0 0
  %110 = vmatpush1.bf16.msra.mxu0 %v92
  %111 = vmatprep.subr.bf16.mxu0 0
  %112 = vmatpush1.bf16.msra.mxu0 %v93
  %113 = vmatprep.subr.bf16.mxu0 0
  %114 = vmatpush1.bf16.msra.mxu0 %v94
  %115 = vmatprep.subr.bf16.mxu0 0
  %116 = vmatpush1.bf16.msra.mxu0 %v95
  %117 = vmatprep.subr.bf16.mxu0 0
  %118 = vmatpush1.bf16.msra.mxu0 %v96
  %119 = vmatprep.subr.bf16.mxu0 0
  %120 = vmatpush1.bf16.msra.mxu0 %v97
  %121 = vmatprep.subr.bf16.mxu0 0
  %122 = vmatpush1.bf16.msra.mxu0 %v98
  %123 = vmatprep.subr.bf16.mxu0 0
  %124 = vmatpush1.bf16.msra.mxu0 0
  %125 = vmatprep.subr.bf16.mxu0 0
  %126 = vmatpush1.bf16.msra.mxu0 0
  %127 = vmatprep.subr.bf16.mxu0 0
  %128 = vmatpush1.bf16.msra.mxu0 0
  %129 = vmatprep.subr.bf16.mxu0 0
  %130 = vmatpush1.bf16.msra.mxu0 0
  %131 = vmatprep.subr.bf16.mxu0 0
  %132 = vmatpush1.bf16.msra.mxu0 0
  %133 = vmatprep.subr.bf16.mxu0 0
  %134 = vmatpush1.bf16.msra.mxu0 0
  %135 = vmatprep.subr.bf16.mxu0 0
  %136 = vmatpush1.bf16.msra.mxu0 0
  %137 = vmatprep.subr.bf16.mxu0 0
  %138 = vmatpush1.bf16.msra.mxu0 0
  %139 = vmatprep.mubr.bf16.mxu0 0
  %140 = vmatmul.mubr.bf16.gmra.mrb[0].mxu0 %v55
  %v141 = vpop.f32.mrb[0].mxu0
  %v142 = vadd.f32 0.0, %v141
  %v143 = vpop.f32.mrb[0].mxu0
  %v144 = vpop.f32.mrb[0].mxu0
  %v145 = vadd.f32 0.0, %v144
  %v146 = vpop.f32.mrb[0].mxu0
  %147 = vmatprep.mubr.bf16.mxu0 0
  %148 = vmatmul.mubr.bf16.gmra.mrb[0].mxu0 %v56
  %v149 = vpop.f32.mrb[0].mxu0
  %v150 = vadd.f32 0.0, %v149
  %v151 = vpop.f32.mrb[0].mxu0
  %v152 = vpop.f32.mrb[0].mxu0
  %v153 = vadd.f32 0.0, %v152
  %v154 = vpop.f32.mrb[0].mxu0
  %155 = vdwg.mxu0
  %v156 = vadd.f32 %v23, %v142
  %v157 = vadd.f32 %v24, %v145
  %v158 = vadd.f32 %v25, %v150
  %v159 = vadd.f32 %v26, %v153
  %160 = vst [vmem:[#allocation2] sm:$0xff] %v156
  %161 = vst [vmem:[#allocation2 + $0x8] sm:$0xff] %v157
  %162 = vst [vmem:[#allocation2 + $0x10] sm:$0xff] %v158
  %163 = vst [vmem:[#allocation2 + $0x18] sm:$0xff] %v159
  // Predicated region
  $region18: #{mae_linear_probing_forward.12} parent=0 // pred_check
    %p164 = pneg %p15
  $region19: #{mae_linear_probing_forward.12} parent=0 // pred_check_branch
    %166 = sbr.rel (%p164) target = $region21
  $region20: #{mae_linear_probing_forward.12} parent=0 // pred_region
    %v167 = vld [vmem:[#allocation2] sm:$0xff]
    %v168 = vld [vmem:[#allocation2 + $0x8] sm:$0xff]
    %v169 = vld [vmem:[#allocation2 + $0x10] sm:$0xff]
    %v170 = vld [vmem:[#allocation2 + $0x18] sm:$0xff]
    %v171 = vld [vmem:[%s2] sm:$0x1]
    %v173 = vlaneseq
    %v174 = vshrl.u32 %v173, 7
    %v175 = vsub.s32 0, %v174
    %v176 = vrot.slane %v171, %v175
    %v178 = vadd.f32 %v167, %v176
    %v179 = vadd.f32 %v168, %v176
    %v180 = vadd.f32 %v169, %v176
    %v181 = vadd.f32 %v170, %v176
    %v182 = vpack.c.bf16 %v179, %v178
    %v183 = vpack.c.bf16 %v181, %v180
    %v186 = vunpack.c.l.b16 %v182
    %v187 = vunpack.c.h.b16 %v182
    %v188 = vunpack.c.l.b16 %v183
    %v189 = vunpack.c.h.b16 %v183
    %v190 = vpack.c.b16 %v186, %v186
    %v191 = vpack.c.b16 %v187, %v187
    %v192 = vpack.c.b16 %v188, %v188
    %v193 = vpack.c.b16 %v189, %v189
    %198 = vst [vmem:[%s3] sm:$0xf] %v190
    %199 = vst [vmem:[%s3 + $0x4] sm:$0xf] %v191
    %200 = vst [vmem:[%s3 + $0x8] sm:$0xf] %v192
    %201 = vst [vmem:[%s3 + $0xc] sm:$0xf] %v193
  $region21: #{mae_linear_probing_forward.12} parent=0 // pred_fallthru
    _
  // Predicated region
  $region22: #{mae_linear_probing_forward.12} parent=0 // pred_check
    _
  $region23: #{mae_linear_probing_forward.12} parent=0 // pred_check_branch
    %203 = sbr.rel (0) target = $region25
  $region24: #{mae_linear_probing_forward.12} parent=0 // pred_region
    _
  $region25: #{mae_linear_probing_forward.12} parent=0 // pred_fallthru
    _
  // Predicated region
  $region26: #{mae_linear_probing_forward.12} parent=0 // pred_check
    _
  $region27: #{mae_linear_probing_forward.12} parent=0 // pred_check_branch
    %205 = sbr.rel (0) target = $region29
  $region28: #{mae_linear_probing_forward.12} parent=0 // pred_region
    _
  $region29: #{mae_linear_probing_forward.12} parent=0 // pred_fallthru
    _

// kernel: mae_linear_probing_forward.14
$region0: #{mae_linear_probing_forward.14}
  #allocation0 [shape = 'u32[]', space=smem, size = 0x4, offset = 0x4, fixed_abs, tag = 'smem constant byte address 0x4 - core index']
  #allocation1 [shape = 'u32[144,128]{1,0:T(1,128)}', space=vmem, size = 0x12000, scoped, tag = 'internal scratch']
  #allocation2 [shape = 'f32[24,1]{1,0:T(8,128)}', space=vmem, size = 0x3000, scoped, tag = 'scratch operand']
  #allocation3 [shape = 'f32[24,1]{1,0:T(8,128)}', space=vmem, size = 0x3000, scoped, tag = 'scratch operand']
  #allocation4 [shape = 'f32[24,128]{1,0:T(8,128)}', space=vmem, size = 0x3000, scoped, tag = 'scratch operand']
  %s0 = inlined_call_operand.vmem [shape: bf16[4,24,128], index: 0, kind: input, shape index: {}]
  %s1 = inlined_call_operand.vmem [shape: bf16[4,24,128], index: 1, kind: input, shape index: {}]
  %s2 = inlined_call_operand.vmem [shape: bf16[4,24,128], index: 2, kind: input, shape index: {}]
  %s3 = inlined_call_operand.vmem [shape: bf16[4,24,128], index: 3, kind: output, shape index: {}]
  %s4 = sld [smem:[#allocation0]]
  $region53: #{mae_linear_probing_forward.14} parent=0
    _
  %s6 = ssub.s32 1, %s4
  %s7 = scalar_select 0, %s6, %s4
  loop: start=0, step=1, limit=6
  $region2: #{mae_linear_probing_forward.14} parent=0 // loop_pre_header
    _
  $region3: #{mae_linear_probing_forward.14} parent=0 // loop_header
    %s9 = sphi 0, %s13
    %p10 = scmp.ge.s32.totalorder %s9, 6
    %s16 = sphi 0, %s35
    %s17 = sphi 0, %s31
    %s18 = sphi 0, %s27
    %s19 = sphi 0, %s16
    %s20 = sphi 0, %s17
    %s21 = sphi 0, %s18
    %s22 = sphi 0, %s19
    %s23 = sphi 0, %s20
    %s24 = sphi 0, %s21
    %s40 = sphi 0, %s42
    %s43 = sphi 0, %s40
    %s44 = sphi 0, %s43
    %s60 = sphi 0, %s44
    %s68 = sphi 0, %s70
    %s71 = sphi 0, %s68
    %s72 = sphi 0, %s71
    %s88 = sphi 0, %s72
    %s96 = sphi 0, %s98
    %s99 = sphi 0, %s96
    %s100 = sphi 0, %s99
    %s116 = sphi 0, %s100
    %s124 = sphi 0, %s126
    %s127 = sphi 0, %s124
    %s128 = sphi 0, %s127
    %s144 = sphi 0, %s128
  $region4: #{mae_linear_probing_forward.14} parent=0 // loop_header_branch
    %12 = sbr.rel (%p10) target = $region8
  $region5: #{mae_linear_probing_forward.14} parent=0 // loop_body
    %s14 = ssub.s32 %s9, 1
    %s15 = ssub.s32 %s9, 2
    %s25 = sadd.s32 1, %s18
    %p26 = scmp.ge.s32.totalorder %s25, 1
    %s27 = scalar_select %p26, 0, %s25
    %s28 = sadd.s32 1, %s17
    %s29 = scalar_select %p26, %s28, %s17
    %p30 = scmp.ge.s32.totalorder %s29, 1
    %s31 = scalar_select %p30, 0, %s29
    %s32 = sadd.s32 1, %s16
    %s33 = scalar_select %p30, %s32, %s16
    %p34 = scmp.ge.s32.totalorder %s33, 4
    %s35 = scalar_select %p34, 0, %s33
    %s36 = ssub.s32 %s16, %s35
    %s37 = ssub.s32 %s17, %s31
    %s38 = sor.u32 %s36, %s37
    %p39 = scmp.eq.s32.totalorder %s38, 0
    %s41 = sadd.s32 %s40, 1
    %s42 = scalar_select %p39, %s40, %s41
    %p45 = pneg %p39
    %p46 = scmp.eq.s32.totalorder %s9, 3
    %p47 = por %p45, %p46
    %p48 = scmp.ne.s32.totalorder %s40, %s43
    %p49 = scmp.eq.s32.totalorder %s9, 0
    %p50 = por %p48, %p49
    %p51 = scmp.ne.s32.totalorder %s40, %s43
    %p52 = scmp.eq.s32.totalorder %s14, 3
    %p53 = por %p51, %p52
    %p54 = scmp.ne.s32.totalorder %s43, %s44
    %p55 = scmp.eq.s32.totalorder %s14, 0
    %p56 = por %p54, %p55
    %p57 = scmp.ne.s32.totalorder %s43, %s44
    %p58 = scmp.eq.s32.totalorder %s15, 3
    %p59 = por %p57, %p58
    %p61 = scmp.ne.s32.totalorder %s44, %s60
    %p62 = scmp.eq.s32.totalorder %s15, 0
    %p63 = por %p61, %p62
    %s64 = ssub.s32 %s16, %s35
    %s65 = ssub.s32 %s18, %s27
    %s66 = sor.u32 %s64, %s65
    %p67 = scmp.eq.s32.totalorder %s66, 0
    %s69 = sadd.s32 %s68, 1
    %s70 = scalar_select %p67, %s68, %s69
    %p73 = pneg %p67
    %p74 = scmp.eq.s32.totalorder %s9, 3
    %p75 = por %p73, %p74
    %p76 = scmp.ne.s32.totalorder %s68, %s71
    %p77 = scmp.eq.s32.totalorder %s9, 0
    %p78 = por %p76, %p77
    %p79 = scmp.ne.s32.totalorder %s68, %s71
    %p80 = scmp.eq.s32.totalorder %s14, 3
    %p81 = por %p79, %p80
    %p82 = scmp.ne.s32.totalorder %s71, %s72
    %p83 = scmp.eq.s32.totalorder %s14, 0
    %p84 = por %p82, %p83
    %p85 = scmp.ne.s32.totalorder %s71, %s72
    %p86 = scmp.eq.s32.totalorder %s15, 3
    %p87 = por %p85, %p86
    %p89 = scmp.ne.s32.totalorder %s72, %s88
    %p90 = scmp.eq.s32.totalorder %s15, 0
    %p91 = por %p89, %p90
    %s92 = ssub.s32 %s16, %s35
    %s93 = ssub.s32 %s18, %s27
    %s94 = sor.u32 %s92, %s93
    %p95 = scmp.eq.s32.totalorder %s94, 0
    %s97 = sadd.s32 %s96, 1
    %s98 = scalar_select %p95, %s96, %s97
    %p101 = pneg %p95
    %p102 = scmp.eq.s32.totalorder %s9, 3
    %p103 = por %p101, %p102
    %p104 = scmp.ne.s32.totalorder %s96, %s99
    %p105 = scmp.eq.s32.totalorder %s9, 0
    %p106 = por %p104, %p105
    %p107 = scmp.ne.s32.totalorder %s96, %s99
    %p108 = scmp.eq.s32.totalorder %s14, 3
    %p109 = por %p107, %p108
    %p110 = scmp.ne.s32.totalorder %s99, %s100
    %p111 = scmp.eq.s32.totalorder %s14, 0
    %p112 = por %p110, %p111
    %p113 = scmp.ne.s32.totalorder %s99, %s100
    %p114 = scmp.eq.s32.totalorder %s15, 3
    %p115 = por %p113, %p114
    %p117 = scmp.ne.s32.totalorder %s100, %s116
    %p118 = scmp.eq.s32.totalorder %s15, 0
    %p119 = por %p117, %p118
    %s120 = ssub.s32 %s16, %s35
    %s121 = ssub.s32 %s17, %s31
    %s122 = sor.u32 %s120, %s121
    %p123 = scmp.eq.s32.totalorder %s122, 0
    %s125 = sadd.s32 %s124, 1
    %s126 = scalar_select %p123, %s124, %s125
    %p129 = pneg %p123
    %p130 = scmp.eq.s32.totalorder %s9, 3
    %p131 = por %p129, %p130
    %p132 = scmp.ne.s32.totalorder %s124, %s127
    %p133 = scmp.eq.s32.totalorder %s9, 0
    %p134 = por %p132, %p133
    %p135 = scmp.ne.s32.totalorder %s124, %s127
    %p136 = scmp.eq.s32.totalorder %s14, 3
    %p137 = por %p135, %p136
    %p138 = scmp.ne.s32.totalorder %s127, %s128
    %p139 = scmp.eq.s32.totalorder %s14, 0
    %p140 = por %p138, %p139
    %p141 = scmp.ne.s32.totalorder %s127, %s128
    %p142 = scmp.eq.s32.totalorder %s15, 3
    %p143 = por %p141, %p142
    %p145 = scmp.ne.s32.totalorder %s128, %s144
    %p146 = scmp.eq.s32.totalorder %s15, 0
    %p147 = por %p145, %p146
    %p148 = scmp.le.s32.totalorder 1, %s9
    %p149 = scmp.lt.s32.totalorder %s9, 5
    %p150 = pnand %p148, %p149
    %p151 = pneg %p150
    // Predicated region
    $region9: #{mae_linear_probing_forward.14} parent=5 // pred_check
      _
    $region10: #{mae_linear_probing_forward.14} parent=5 // pred_check_branch
      %153 = sbr.rel (%p150) target = $region12
    $region11: #{mae_linear_probing_forward.14} parent=5 // pred_region
      %s154 = ssub.s32 %s9, 1
    $region12: #{mae_linear_probing_forward.14} parent=5 // pred_fallthru
      _
    %p155 = scmp.lt.s32.totalorder %s9, 4
    // Predicated region
    $region13: #{mae_linear_probing_forward.14} parent=5 // pred_check
      %p156 = pneg %p155
    $region14: #{mae_linear_probing_forward.14} parent=5 // pred_check_branch
      %158 = sbr.rel (%p156) target = $region16
    $region15: #{mae_linear_probing_forward.14} parent=5 // pred_region
      // Predicated region
      $region17: #{mae_linear_probing_forward.14} parent=15 // pred_check
        %p159 = pneg %p50
      $region18: #{mae_linear_probing_forward.14} parent=15 // pred_check_branch
        %161 = sbr.rel (%p159) target = $region20
      $region19: #{mae_linear_probing_forward.14} parent=15 // pred_region
        %s162 = smul.u32 3, %s17
        %p163 = scmp.lt.s32.totalorder %s16, 3
        %s164 = scalar_select %p163, %s16, 3
        %p165 = scmp.lt.s32.totalorder %s162, 2
        %s166 = scalar_select %p165, %s162, 2
        %s167 = smul.addr %s164, 3
        %s168 = sadd.s32 %s166, %s167
        %s169 = smul.addr %s168, 4
        %s170 = scalar_lea.vmem %s0, %s169
        %s171 = smul.u32 3, %s17
      $region20: #{mae_linear_probing_forward.14} parent=15 // pred_fallthru
        _
      // Predicated region
      $region21: #{mae_linear_probing_forward.14} parent=15 // pred_check
        %p172 = pneg %p78
      $region22: #{mae_linear_probing_forward.14} parent=15 // pred_check_branch
        %174 = sbr.rel (%p172) target = $region24
      $region23: #{mae_linear_probing_forward.14} parent=15 // pred_region
        %s175 = smul.u32 3, %s18
        %p176 = scmp.lt.s32.totalorder %s16, 3
        %s177 = scalar_select %p176, %s16, 3
        %p178 = scmp.lt.s32.totalorder %s175, 2
        %s179 = scalar_select %p178, %s175, 2
        %s180 = smul.addr %s177, 3
        %s181 = sadd.s32 %s179, %s180
        %s182 = smul.addr %s181, 4
        %s183 = scalar_lea.vmem %s1, %s182
        %s184 = smul.u32 3, %s18
      $region24: #{mae_linear_probing_forward.14} parent=15 // pred_fallthru
        _
      // Predicated region
      $region25: #{mae_linear_probing_forward.14} parent=15 // pred_check
        %p185 = pneg %p106
      $region26: #{mae_linear_probing_forward.14} parent=15 // pred_check_branch
        %187 = sbr.rel (%p185) target = $region28
      $region27: #{mae_linear_probing_forward.14} parent=15 // pred_region
        %s188 = smul.u32 3, %s18
        %p189 = scmp.lt.s32.totalorder %s16, 3
        %s190 = scalar_select %p189, %s16, 3
        %p191 = scmp.lt.s32.totalorder %s188, 2
        %s192 = scalar_select %p191, %s188, 2
        %s193 = smul.addr %s190, 3
        %s194 = sadd.s32 %s192, %s193
        %s195 = smul.addr %s194, 4
        %s196 = scalar_lea.vmem %s2, %s195
        %s197 = smul.u32 3, %s18
      $region28: #{mae_linear_probing_forward.14} parent=15 // pred_fallthru
        _
    $region16: #{mae_linear_probing_forward.14} parent=5 // pred_fallthru
      _
    %p198 = scmp.le.s32.totalorder 1, %s9
    %p199 = scmp.lt.s32.totalorder %s9, 5
    %p200 = pnand %p198, %p199
    %p201 = pneg %p200
    // Predicated region
    $region29: #{mae_linear_probing_forward.14} parent=5 // pred_check
      _
    $region30: #{mae_linear_probing_forward.14} parent=5 // pred_check_branch
      %203 = sbr.rel (%p200) target = $region32
    $region31: #{mae_linear_probing_forward.14} parent=5 // pred_region
      %s204 = ssub.s32 %s9, 1
      %s205 = smul.u32 3, %s20
      %p206 = scmp.lt.s32.totalorder %s19, 3
      %s207 = scalar_select %p206, %s19, 3
      %p208 = scmp.lt.s32.totalorder %s205, 2
      %s209 = scalar_select %p208, %s205, 2
      %s210 = smul.addr %s207, 3
      %s211 = sadd.s32 %s209, %s210
      %s212 = smul.addr %s211, 4
      %s213 = scalar_lea.vmem %s0, %s212
      %p214 = pneg %p56
      %p215 = pneg %p53
      %s216 = smul.u32 3, %s21
      %p217 = scmp.lt.s32.totalorder %s19, 3
      %s218 = scalar_select %p217, %s19, 3
      %p219 = scmp.lt.s32.totalorder %s216, 2
      %s220 = scalar_select %p219, %s216, 2
      %s221 = smul.addr %s218, 3
      %s222 = sadd.s32 %s220, %s221
      %s223 = smul.addr %s222, 4
      %s224 = scalar_lea.vmem %s1, %s223
      %p225 = pneg %p84
      %p226 = pneg %p81
      %s227 = smul.u32 3, %s21
      %p228 = scmp.lt.s32.totalorder %s19, 3
      %s229 = scalar_select %p228, %s19, 3
      %p230 = scmp.lt.s32.totalorder %s227, 2
      %s231 = scalar_select %p230, %s227, 2
      %s232 = smul.addr %s229, 3
      %s233 = sadd.s32 %s231, %s232
      %s234 = smul.addr %s233, 4
      %s235 = scalar_lea.vmem %s2, %s234
      %p236 = pneg %p112
      %p237 = pneg %p109
      %p238 = pneg %p140
      %p239 = pneg %p137
      %s240 = smul.u32 3, %s20
      %p241 = scmp.lt.s32.totalorder %s19, 3
      %s242 = scalar_select %p241, %s19, 3
      %p243 = scmp.lt.s32.totalorder %s240, 2
      %s244 = scalar_select %p243, %s240, 2
      %s245 = smul.addr %s242, 3
      %s246 = sadd.s32 %s244, %s245
      %s247 = smul.addr %s246, 4
      %s248 = scalar_lea.vmem %s3, %s247
      %s249 = smul.u32 3, %s20
      %p250 = scmp.lt.s32.totalorder %s19, 3
      %s251 = scalar_select %p250, %s19, 3
      %p252 = scmp.lt.s32.totalorder %s249, 2
      %s253 = scalar_select %p252, %s249, 2
      %s254 = smul.addr %s251, 3
      %s255 = sadd.s32 %s253, %s254
      %s256 = smul.addr %s255, 4
      %s257 = scalar_lea.vmem %s0, %s256
      %s258 = smul.u32 3, %s20
      %s259 = smul.u32 3, %s21
      %p260 = scmp.lt.s32.totalorder %s19, 3
      %s261 = scalar_select %p260, %s19, 3
      %p262 = scmp.lt.s32.totalorder %s259, 2
      %s263 = scalar_select %p262, %s259, 2
      %s264 = smul.addr %s261, 3
      %s265 = sadd.s32 %s263, %s264
      %s266 = smul.addr %s265, 4
      %s267 = scalar_lea.vmem %s1, %s266
      %s268 = smul.u32 3, %s21
      %s269 = smul.u32 3, %s21
      %p270 = scmp.lt.s32.totalorder %s19, 3
      %s271 = scalar_select %p270, %s19, 3
      %p272 = scmp.lt.s32.totalorder %s269, 2
      %s273 = scalar_select %p272, %s269, 2
      %s274 = smul.addr %s271, 3
      %s275 = sadd.s32 %s273, %s274
      %s276 = smul.addr %s275, 4
      %s277 = scalar_lea.vmem %s2, %s276
      %s278 = smul.u32 3, %s21
      %s279 = smul.u32 3, %s20
      %p280 = scmp.lt.s32.totalorder %s19, 3
      %s281 = scalar_select %p280, %s19, 3
      %p282 = scmp.lt.s32.totalorder %s279, 2
      %s283 = scalar_select %p282, %s279, 2
      %s284 = smul.addr %s281, 3
      %s285 = sadd.s32 %s283, %s284
      %s286 = smul.addr %s285, 4
      %s287 = scalar_lea.vmem %s3, %s286
      %s288 = smul.u32 3, %s20
      %p290 = scmp.eq.s32.totalorder %s21, 0
      // Predicated region
      $region33: #{mae_linear_probing_forward.14} parent=31 // pred_check
        %p291 = pneg %p290
      $region34: #{mae_linear_probing_forward.14} parent=31 // pred_check_branch
        %293 = sbr.rel (%p291) target = $region36
      $region35: #{mae_linear_probing_forward.14} parent=31 // pred_region
        %vm294 = vcmask 7168
        %295 = vst.msk [vmem:[#allocation2] sm:$0xff] %vm294, -1e+30
        %296 = vst.msk [vmem:[#allocation2 + $0x8] sm:$0xff] %vm294, -1e+30
        %297 = vst.msk [vmem:[#allocation2 + $0x10] sm:$0xff] %vm294, -1e+30
        %298 = vst.msk [vmem:[#allocation3] sm:$0xff] %vm294, 0.0
        %299 = vst.msk [vmem:[#allocation3 + $0x8] sm:$0xff] %vm294, 0.0
        %300 = vst.msk [vmem:[#allocation3 + $0x10] sm:$0xff] %vm294, 0.0
        %301 = vst [vmem:[#allocation4] sm:$0xff] 0.0
        %302 = vst [vmem:[#allocation4 + $0x8] sm:$0xff] 0.0
        %303 = vst [vmem:[#allocation4 + $0x10] sm:$0xff] 0.0
      $region36: #{mae_linear_probing_forward.14} parent=31 // pred_fallthru
        _
      %v304 = vld [vmem:[%s257] sm:$0xf]
      %v305 = vld [vmem:[%s257 + $0x4] sm:$0xf]
      %v306 = vld [vmem:[%s257 + $0x8] sm:$0xf]
      %v307 = vld [vmem:[%s267] sm:$0xf]
      %v308 = vld [vmem:[%s267 + $0x4] sm:$0xf]
      %v309 = vld [vmem:[%s267 + $0x8] sm:$0xf]
      %v313 = vunpack.c.l.b16 %v304
      %v314 = vunpack.c.l.b16 %v305
      %v315 = vunpack.c.l.b16 %v306
      %v316 = vpack.c.b16 %v314, %v313
      %v317 = vpack.c.b16 %v315, %v315
      %v323 = vunpack.c.l.b16 %v307
      %v324 = vunpack.c.l.b16 %v308
      %v325 = vunpack.c.l.b16 %v309
      %v326 = vpack.c.b16 %v324, %v323
      %v327 = vpack.c.b16 %v325, %v325
      %330 = vmatprep.subr.bf16.mxu0 0
      %331 = vmatpush1.bf16.xpose.msra.mxu0 %v326
      %332 = vmatprep.subr.bf16.mxu0 0
      %333 = vmatpush1.bf16.xpose.msra.mxu0 %v327
      %334 = vmatprep.subr.bf16.mxu0 0
      %335 = vmatpush1.bf16.xpose.msra.mxu0 0
      %336 = vmatprep.subr.bf16.mxu0 0
      %337 = vmatpush1.bf16.xpose.msra.mxu0 0
      %338 = vmatprep.subr.bf16.mxu0 0
      %339 = vmatpush1.bf16.xpose.msra.mxu0 0
      %340 = vmatprep.subr.bf16.mxu0 0
      %341 = vmatpush1.bf16.xpose.msra.mxu0 0
      %342 = vmatprep.subr.bf16.mxu0 0
      %343 = vmatpush1.bf16.xpose.msra.mxu0 0
      %344 = vmatprep.subr.bf16.mxu0 0
      %345 = vmatpush1.bf16.xpose.msra.mxu0 0
      %346 = vmatprep.subr.bf16.mxu0 0
      %347 = vmatpush1.bf16.xpose.msra.mxu0 0
      %348 = vmatprep.subr.bf16.mxu0 0
      %349 = vmatpush1.bf16.xpose.msra.mxu0 0
      %350 = vmatprep.subr.bf16.mxu0 0
      %351 = vmatpush1.bf16.xpose.msra.mxu0 0
      %352 = vmatprep.subr.bf16.mxu0 0
      %353 = vmatpush1.bf16.xpose.msra.mxu0 0
      %354 = vmatprep.subr.bf16.mxu0 0
      %355 = vmatpush1.bf16.xpose.msra.mxu0 0
      %356 = vmatprep.subr.bf16.mxu0 0
      %357 = vmatpush1.bf16.xpose.msra.mxu0 0
      %358 = vmatprep.subr.bf16.mxu0 0
      %359 = vmatpush1.bf16.xpose.msra.mxu0 0
      %360 = vmatprep.subr.bf16.mxu0 0
      %361 = vmatpush1.bf16.xpose.msra.mxu0 0
      %362 = vmatprep.mubr.bf16.mxu0 0
      %363 = vmatmul.mubr.bf16.gmra.mrb[0].mxu0 %v316
      %v364 = vpop.f32.mrb[0].mxu0
      %v365 = vadd.f32 0.0, %v364
      %v366 = vpop.f32.mrb[0].mxu0
      %v367 = vpop.f32.mrb[0].mxu0
      %v368 = vadd.f32 0.0, %v367
      %v369 = vpop.f32.mrb[0].mxu0
      %370 = vmatprep.mubr.bf16.mxu0 0
      %371 = vmatmul.mubr.bf16.gmra.mrb[0].mxu0 %v317
      %v372 = vpop.f32.mrb[0].mxu0
      %v373 = vadd.f32 0.0, %v372
      %v374 = vpop.f32.mrb[0].mxu0
      %v375 = vpop.f32.mrb[0].mxu0
      %v376 = vpop.f32.mrb[0].mxu0
      %377 = vdwg.mxu0
      %v378 = vmul.f32 %v365, 0.25
      %v379 = vmul.f32 %v368, 0.25
      %v380 = vmul.f32 %v373, 0.25
      %s381 = smul.u32 %s21, 24
      %v382 = vlaneseq
      %v383 = vand.u32 %v382, 127
      %v384 = vstv %s381
      %v385 = vadd.s32 %v384, %v383
      %vm386 = vcmp.lt.s32.totalorder %v385, 17
      %v387 = vsel %vm386, %v378, -1e+30
      %v388 = vsel %vm386, %v379, -1e+30
      %v389 = vsel %vm386, %v380, -1e+30
      %v390 = vld [vmem:[#allocation2] sm:$0xff]
      %v391 = vld [vmem:[#allocation2 + $0x8] sm:$0xff]
      %v392 = vld [vmem:[#allocation2 + $0x10] sm:$0xff]
      %vm393 = vcmask 195584
      %v394 = vsel %vm393, %v387, -inf
      %395 = vmax.xlane.f32.xlu0 %v394
      %v396 = vpop.xlane.xlu0 %395
      %v397 = vsel %vm393, %v388, -inf
      %398 = vmax.xlane.f32.xlu0 %v397
      %v399 = vpop.xlane.xlu0 %398
      %v400 = vsel %vm393, %v389, -inf
      %401 = vmax.xlane.f32.xlu0 %v400
      %v402 = vpop.xlane.xlu0 %401
      %v403 = vmax.f32 %v390, %v396
      %v404 = vmax.f32 %v391, %v399
      %v405 = vmax.f32 %v392, %v402
      %v406 = vsub.f32 %v390, %v403
      %v407 = vsub.f32 %v391, %v404
      %v408 = vsub.f32 %v392, %v405
      %v409 = vmul.f32 %v406, 1.442695
      %v410 = vpow.pop %v409
      %v411 = vmul.f32 %v407, 1.442695
      %v412 = vpow.pop %v411
      %v413 = vmul.f32 %v408, 1.442695
      %v414 = vpow.pop %v413
      %416 = vset.pattern.permute.xlu0 0
      %417 = vperm.xlu0 %416, %v403
      %v418 = vpop.permute.xlu0 %417
      %421 = vset.pattern.permute.xlu0 0
      %422 = vperm.xlu0 %421, %v404
      %v423 = vpop.permute.xlu0 %422
      %426 = vset.pattern.permute.xlu0 0
      %427 = vperm.xlu0 %426, %v405
      %v428 = vpop.permute.xlu0 %427
      %v430 = vsub.f32 %v387, %v418
      %v431 = vsub.f32 %v388, %v423
      %v432 = vsub.f32 %v389, %v428
      %v433 = vmul.f32 %v430, 1.442695
      %v434 = vpow.pop %v433
      %v435 = vmul.f32 %v431, 1.442695
      %v436 = vpow.pop %v435
      %v437 = vmul.f32 %v432, 1.442695
      %v438 = vpow.pop %v437
      %v439 = vld [vmem:[#allocation3] sm:$0xff]
      %v440 = vld [vmem:[#allocation3 + $0x8] sm:$0xff]
      %v441 = vld [vmem:[#allocation3 + $0x10] sm:$0xff]
      %v442 = vmul.f32 %v410, %v439
      %v443 = vmul.f32 %v412, %v440
      %v444 = vmul.f32 %v414, %v441
      %v445 = vsel %vm393, %v434, 0.0
      %446 = vadd.xlane.f32.xlu0 %v445
      %v447 = vpop.xlane.xlu0 %446
      %v448 = vsel %vm393, %v436, 0.0
      %449 = vadd.xlane.f32.xlu0 %v448
      %v450 = vpop.xlane.xlu0 %449
      %v451 = vsel %vm393, %v438, 0.0
      %452 = vadd.xlane.f32.xlu0 %v451
      %v453 = vpop.xlane.xlu0 %452
      %v454 = vadd.f32 %v442, %v447
      %v455 = vadd.f32 %v443, %v450
      %v456 = vadd.f32 %v444, %v453
      %vm457 = vcmask 7168
      %458 = vst.msk [vmem:[#allocation3] sm:$0xff] %vm457, %v454
      %459 = vst.msk [vmem:[#allocation3 + $0x8] sm:$0xff] %vm457, %v455
      %460 = vst.msk [vmem:[#allocation3 + $0x10] sm:$0xff] %vm457, %v456
      %v461 = vld [vmem:[#allocation4] sm:$0xff]
      %v462 = vld [vmem:[#allocation4 + $0x8] sm:$0xff]
      %v463 = vld [vmem:[#allocation4 + $0x10] sm:$0xff]
      %465 = vset.pattern.permute.xlu0 0
      %466 = vperm.xlu0 %465, %v410
      %v467 = vpop.permute.xlu0 %466
      %470 = vset.pattern.permute.xlu0 0
      %471 = vperm.xlu0 %470, %v412
      %v472 = vpop.permute.xlu0 %471
      %475 = vset.pattern.permute.xlu0 0
      %476 = vperm.xlu0 %475, %v414
      %v477 = vpop.permute.xlu0 %476
      %v479 = vmul.f32 %v467, %v461
      %v480 = vmul.f32 %v472, %v462
      %v481 = vmul.f32 %v477, %v463
      %v482 = vpack.c.bf16 %v436, %v434
      %v483 = vpack.c.bf16 %v438, %v438
      %v484 = vld [vmem:[%s277] sm:$0xf]
      %v485 = vld [vmem:[%s277 + $0x4] sm:$0xf]
      %v486 = vld [vmem:[%s277 + $0x8] sm:$0xf]
      %v490 = vunpack.c.l.b16 %v484
      %v491 = vunpack.c.l.b16 %v485
      %v492 = vunpack.c.l.b16 %v486
      %v493 = vpack.c.b16 %v491, %v490
      %v494 = vpack.c.b16 %v492, %v492
      %v497 = vsel %vm393, %v482, 0
      %v500 = vsel %vm393, %v483, 0
      %vm502 = vcmask 1043456
      %v504 = vsel %vm502, %v494, 0
      %506 = vmatprep.subr.bf16.mxu0 0
      %507 = vmatpush1.bf16.msra.mxu0 %v493
      %508 = vmatprep.subr.bf16.mxu0 0
      %509 = vmatpush1.bf16.msra.mxu0 %v504
      %510 = vmatprep.subr.bf16.mxu0 0
      %511 = vmatpush1.bf16.msra.mxu0 0
      %512 = vmatprep.subr.bf16.mxu0 0
      %513 = vmatpush1.bf16.msra.mxu0 0
      %514 = vmatprep.subr.bf16.mxu0 0
      %515 = vmatpush1.bf16.msra.mxu0 0
      %516 = vmatprep.subr.bf16.mxu0 0
      %517 = vmatpush1.bf16.msra.mxu0 0
      %518 = vmatprep.subr.bf16.mxu0 0
      %519 = vmatpush1.bf16.msra.mxu0 0
      %520 = vmatprep.subr.bf16.mxu0 0
      %521 = vmatpush1.bf16.msra.mxu0 0
      %522 = vmatprep.subr.bf16.mxu0 0
      %523 = vmatpush1.bf16.msra.mxu0 0
      %524 = vmatprep.subr.bf16.mxu0 0
      %525 = vmatpush1.bf16.msra.mxu0 0
      %526 = vmatprep.subr.bf16.mxu0 0
      %527 = vmatpush1.bf16.msra.mxu0 0
      %528 = vmatprep.subr.bf16.mxu0 0
      %529 = vmatpush1.bf16.msra.mxu0 0
      %530 = vmatprep.subr.bf16.mxu0 0
      %531 = vmatpush1.bf16.msra.mxu0 0
      %532 = vmatprep.subr.bf16.mxu0 0
      %533 = vmatpush1.bf16.msra.mxu0 0
      %534 = vmatprep.subr.bf16.mxu0 0
      %535 = vmatpush1.bf16.msra.mxu0 0
      %536 = vmatprep.subr.bf16.mxu0 0
      %537 = vmatpush1.bf16.msra.mxu0 0
      %538 = vmatprep.mubr.bf16.mxu0 0
      %539 = vmatmul.mubr.bf16.gmra.mrb[0].mxu0 %v497
      %v540 = vpop.f32.mrb[0].mxu0
      %v541 = vadd.f32 0.0, %v540
      %v542 = vpop.f32.mrb[0].mxu0
      %v543 = vpop.f32.mrb[0].mxu0
      %v544 = vadd.f32 0.0, %v543
      %v545 = vpop.f32.mrb[0].mxu0
      %546 = vmatprep.mubr.bf16.mxu0 0
      %547 = vmatmul.mubr.bf16.gmra.mrb[0].mxu0 %v500
      %v548 = vpop.f32.mrb[0].mxu0
      %v549 = vadd.f32 0.0, %v548
      %v550 = vpop.f32.mrb[0].mxu0
      %v551 = vpop.f32.mrb[0].mxu0
      %v552 = vpop.f32.mrb[0].mxu0
      %553 = vdwg.mxu0
      %v554 = vadd.f32 %v479, %v541
      %v555 = vadd.f32 %v480, %v544
      %v556 = vadd.f32 %v481, %v549
      %557 = vst [vmem:[#allocation4] sm:$0xff] %v554
      %558 = vst [vmem:[#allocation4 + $0x8] sm:$0xff] %v555
      %559 = vst [vmem:[#allocation4 + $0x10] sm:$0xff] %v556
      %560 = vst.msk [vmem:[#allocation2] sm:$0xff] %vm457, %v403
      %561 = vst.msk [vmem:[#allocation2 + $0x8] sm:$0xff] %vm457, %v404
      %562 = vst.msk [vmem:[#allocation2 + $0x10] sm:$0xff] %vm457, %v405
      // Predicated region
      $region37: #{mae_linear_probing_forward.14} parent=31 // pred_check
        %p563 = pneg %p290
      $region38: #{mae_linear_probing_forward.14} parent=31 // pred_check_branch
        %565 = sbr.rel (%p563) target = $region40
      $region39: #{mae_linear_probing_forward.14} parent=31 // pred_region
        %v566 = vld [vmem:[#allocation3] sm:$0xff]
        %v567 = vld [vmem:[#allocation3 + $0x8] sm:$0xff]
        %v568 = vld [vmem:[#allocation3 + $0x10] sm:$0xff]
        %v569 = vrcp.pop %v566
        %v570 = vrcp.pop %v567
        %v571 = vrcp.pop %v568
        %v572 = vld [vmem:[#allocation4] sm:$0xff]
        %v573 = vld [vmem:[#allocation4 + $0x8] sm:$0xff]
        %v574 = vld [vmem:[#allocation4 + $0x10] sm:$0xff]
        %576 = vset.pattern.permute.xlu0 0
        %577 = vperm.xlu0 %576, %v569
        %v578 = vpop.permute.xlu0 %577
        %581 = vset.pattern.permute.xlu0 0
        %582 = vperm.xlu0 %581, %v570
        %v583 = vpop.permute.xlu0 %582
        %586 = vset.pattern.permute.xlu0 0
        %587 = vperm.xlu0 %586, %v571
        %v588 = vpop.permute.xlu0 %587
        %v590 = vmul.f32 %v572, %v578
        %v591 = vmul.f32 %v573, %v583
        %v592 = vmul.f32 %v574, %v588
        %v593 = vpack.c.bf16 %v591, %v590
        %v594 = vpack.c.bf16 %v592, %v592
        %v597 = vunpack.c.l.b16 %v593
        %v598 = vunpack.c.h.b16 %v593
        %v599 = vunpack.c.l.b16 %v594
        %v600 = vpack.c.b16 %v597, %v597
        %v601 = vpack.c.b16 %v598, %v598
        %v602 = vpack.c.b16 %v599, %v599
        %606 = vst [vmem:[%s287] sm:$0xf] %v600
        %607 = vst [vmem:[%s287 + $0x4] sm:$0xf] %v601
        %608 = vst [vmem:[%s287 + $0x8] sm:$0xf] %v602
      $region40: #{mae_linear_probing_forward.14} parent=31 // pred_fallthru
        _
      %s609 = smul.u32 3, %s20
      %p610 = scmp.lt.s32.totalorder %s19, 3
      %s611 = scalar_select %p610, %s19, 3
      %p612 = scmp.lt.s32.totalorder %s609, 2
      %s613 = scalar_select %p612, %s609, 2
      %s614 = smul.addr %s611, 3
      %s615 = sadd.s32 %s613, %s614
      %s616 = smul.addr %s615, 4
      %s617 = scalar_lea.vmem %s3, %s616
      // Predicated region
      $region41: #{mae_linear_probing_forward.14} parent=31 // pred_check
        %p618 = pneg %p137
      $region42: #{mae_linear_probing_forward.14} parent=31 // pred_check_branch
        %620 = sbr.rel (%p618) target = $region44
      $region43: #{mae_linear_probing_forward.14} parent=31 // pred_region
        %s621 = smul.u32 3, %s20
      $region44: #{mae_linear_probing_forward.14} parent=31 // pred_fallthru
        _
    $region32: #{mae_linear_probing_forward.14} parent=5 // pred_fallthru
      _
    %p622 = scmp.le.s32.totalorder 2, %s9
    // Predicated region
    $region45: #{mae_linear_probing_forward.14} parent=5 // pred_check
      %p623 = pneg %p622
    $region46: #{mae_linear_probing_forward.14} parent=5 // pred_check_branch
      %625 = sbr.rel (%p623) target = $region48
    $region47: #{mae_linear_probing_forward.14} parent=5 // pred_region
      %s626 = ssub.s32 %s9, 2
      // Predicated region
      $region49: #{mae_linear_probing_forward.14} parent=47 // pred_check
        %p627 = pneg %p143
      $region50: #{mae_linear_probing_forward.14} parent=47 // pred_check_branch
        %629 = sbr.rel (%p627) target = $region52
      $region51: #{mae_linear_probing_forward.14} parent=47 // pred_region
        %s630 = smul.u32 3, %s23
        %p631 = scmp.lt.s32.totalorder %s22, 3
        %s632 = scalar_select %p631, %s22, 3
        %p633 = scmp.lt.s32.totalorder %s630, 2
        %s634 = scalar_select %p633, %s630, 2
        %s635 = smul.addr %s632, 3
        %s636 = sadd.s32 %s634, %s635
        %s637 = smul.addr %s636, 4
        %s638 = scalar_lea.vmem %s3, %s637
      $region52: #{mae_linear_probing_forward.14} parent=47 // pred_fallthru
        _
    $region48: #{mae_linear_probing_forward.14} parent=5 // pred_fallthru
      _
  $region6: #{mae_linear_probing_forward.14} parent=0 // loop_footer
    %s13 = sadd.s32 1, %s9
  $region7: #{mae_linear_probing_forward.14} parent=0 // loop_footer_branch
    %8 = sbr.rel target = $region3
  $region8: #{mae_linear_probing_forward.14} parent=0 // loop_exit
    _

// kernel: mae_linear_probing_forward.15
$region0: #{mae_linear_probing_forward.15}
  #allocation0 [shape = 'u32[]', space=smem, size = 0x4, offset = 0x4, fixed_abs, tag = 'smem constant byte address 0x4 - core index']
  #allocation1 [shape = 'u32[144,128]{1,0:T(1,128)}', space=vmem, size = 0x12000, scoped, tag = 'internal scratch']
  #allocation2 [shape = 'f32[40,128]{1,0:T(8,128)}', space=vmem, size = 0x5000, scoped, tag = 'scratch operand']
  %s0 = inlined_call_operand.vmem [shape: bf16[40,128], index: 0, kind: input, shape index: {}]
  %s1 = inlined_call_operand.vmem [shape: bf16[128,128], index: 1, kind: input, shape index: {}]
  %s2 = inlined_call_operand.vmem [shape: f32[1,128], index: 2, kind: input, shape index: {}]
  %s3 = inlined_call_operand.vmem [shape: bf16[40,128], index: 3, kind: input, shape index: {}]
  %s4 = inlined_call_operand.vmem [shape: bf16[40,128], index: 4, kind: output, shape index: {}]
  %s5 = sld [smem:[#allocation0]]
  $region34: #{mae_linear_probing_forward.15} parent=0
    _
  %s7 = ssub.s32 1, %s5
  %s8 = scalar_select 0, %s7, %s5
  // Predicated region
  $region2: #{mae_linear_probing_forward.15} parent=0 // pred_check
    _
  $region3: #{mae_linear_probing_forward.15} parent=0 // pred_check_branch
    %10 = sbr.rel (0) target = $region5
  $region4: #{mae_linear_probing_forward.15} parent=0 // pred_region
    _
  $region5: #{mae_linear_probing_forward.15} parent=0 // pred_fallthru
    _
  // Predicated region
  $region6: #{mae_linear_probing_forward.15} parent=0 // pred_check
    _
  $region7: #{mae_linear_probing_forward.15} parent=0 // pred_check_branch
    %12 = sbr.rel (0) target = $region9
  $region8: #{mae_linear_probing_forward.15} parent=0 // pred_region
    _
  $region9: #{mae_linear_probing_forward.15} parent=0 // pred_fallthru
    _
  // Predicated region
  $region10: #{mae_linear_probing_forward.15} parent=0 // pred_check
    _
  $region11: #{mae_linear_probing_forward.15} parent=0 // pred_check_branch
    %14 = sbr.rel (0) target = $region13
  $region12: #{mae_linear_probing_forward.15} parent=0 // pred_region
    _
  $region13: #{mae_linear_probing_forward.15} parent=0 // pred_fallthru
    _
  // Predicated region
  $region14: #{mae_linear_probing_forward.15} parent=0 // pred_check
    _
  $region15: #{mae_linear_probing_forward.15} parent=0 // pred_check_branch
    %16 = sbr.rel (0) target = $region17
  $region16: #{mae_linear_probing_forward.15} parent=0 // pred_region
    _
  $region17: #{mae_linear_probing_forward.15} parent=0 // pred_fallthru
    _
  %p18 = scmp.eq.s32.totalorder 0, 0
  // Predicated region
  $region18: #{mae_linear_probing_forward.15} parent=0 // pred_check
    %p19 = pneg %p18
  $region19: #{mae_linear_probing_forward.15} parent=0 // pred_check_branch
    %21 = sbr.rel (%p19) target = $region21
  $region20: #{mae_linear_probing_forward.15} parent=0 // pred_region
    %22 = vst [vmem:[#allocation2] sm:$0xff] 0.0
    %23 = vst [vmem:[#allocation2 + $0x8] sm:$0xff] 0.0
    %24 = vst [vmem:[#allocation2 + $0x10] sm:$0xff] 0.0
    %25 = vst [vmem:[#allocation2 + $0x18] sm:$0xff] 0.0
    %26 = vst [vmem:[#allocation2 + $0x20] sm:$0xff] 0.0
  $region21: #{mae_linear_probing_forward.15} parent=0 // pred_fallthru
    _
  %v27 = vld [vmem:[#allocation2] sm:$0xff]
  %v28 = vld [vmem:[#allocation2 + $0x8] sm:$0xff]
  %v29 = vld [vmem:[#allocation2 + $0x10] sm:$0xff]
  %v30 = vld [vmem:[#allocation2 + $0x18] sm:$0xff]
  %v31 = vld [vmem:[#allocation2 + $0x20] sm:$0xff]
  %v32 = vld [vmem:[%s0] sm:$0xf]
  %v33 = vld [vmem:[%s0 + $0x4] sm:$0xf]
  %v34 = vld [vmem:[%s0 + $0x8] sm:$0xf]
  %v35 = vld [vmem:[%s0 + $0xc] sm:$0xf]
  %v36 = vld [vmem:[%s0 + $0x10] sm:$0xf]
  %v37 = vld [vmem:[%s1] sm:$0xf]
  %v38 = vld [vmem:[%s1 + $0x4] sm:$0xf]
  %v39 = vld [vmem:[%s1 + $0x8] sm:$0xf]
  %v40 = vld [vmem:[%s1 + $0xc] sm:$0xf]
  %v41 = vld [vmem:[%s1 + $0x10] sm:$0xf]
  %v42 = vld [vmem:[%s1 + $0x14] sm:$0xf]
  %v43 = vld [vmem:[%s1 + $0x18] sm:$0xf]
  %v44 = vld [vmem:[%s1 + $0x1c] sm:$0xf]
  %v45 = vld [vmem:[%s1 + $0x20] sm:$0xf]
  %v46 = vld [vmem:[%s1 + $0x24] sm:$0xf]
  %v47 = vld [vmem:[%s1 + $0x28] sm:$0xf]
  %v48 = vld [vmem:[%s1 + $0x2c] sm:$0xf]
  %v49 = vld [vmem:[%s1 + $0x30] sm:$0xf]
  %v50 = vld [vmem:[%s1 + $0x34] sm:$0xf]
  %v51 = vld [vmem:[%s1 + $0x38] sm:$0xf]
  %v52 = vld [vmem:[%s1 + $0x3c] sm:$0xf]
  %v58 = vunpack.c.l.b16 %v32
  %v59 = vunpack.c.l.b16 %v33
  %v60 = vunpack.c.l.b16 %v34
  %v61 = vunpack.c.l.b16 %v35
  %v62 = vunpack.c.l.b16 %v36
  %v63 = vpack.c.b16 %v59, %v58
  %v64 = vpack.c.b16 %v61, %v60
  %v65 = vpack.c.b16 %v62, %v62
  %v85 = vunpack.c.l.b16 %v37
  %v86 = vunpack.c.l.b16 %v38
  %v87 = vunpack.c.l.b16 %v39
  %v88 = vunpack.c.l.b16 %v40
  %v89 = vunpack.c.l.b16 %v41
  %v90 = vunpack.c.l.b16 %v42
  %v91 = vunpack.c.l.b16 %v43
  %v92 = vunpack.c.l.b16 %v44
  %v93 = vunpack.c.l.b16 %v45
  %v94 = vunpack.c.l.b16 %v46
  %v95 = vunpack.c.l.b16 %v47
  %v96 = vunpack.c.l.b16 %v48
  %v97 = vunpack.c.l.b16 %v49
  %v98 = vunpack.c.l.b16 %v50
  %v99 = vunpack.c.l.b16 %v51
  %v100 = vunpack.c.l.b16 %v52
  %v101 = vpack.c.b16 %v86, %v85
  %v102 = vpack.c.b16 %v88, %v87
  %v103 = vpack.c.b16 %v90, %v89
  %v104 = vpack.c.b16 %v92, %v91
  %v105 = vpack.c.b16 %v94, %v93
  %v106 = vpack.c.b16 %v96, %v95
  %v107 = vpack.c.b16 %v98, %v97
  %v108 = vpack.c.b16 %v100, %v99
  %117 = vmatprep.subr.bf16.mxu0 0
  %118 = vmatpush1.bf16.msra.mxu0 %v101
  %119 = vmatprep.subr.bf16.mxu0 0
  %120 = vmatpush1.bf16.msra.mxu0 %v102
  %121 = vmatprep.subr.bf16.mxu0 0
  %122 = vmatpush1.bf16.msra.mxu0 %v103
  %123 = vmatprep.subr.bf16.mxu0 0
  %124 = vmatpush1.bf16.msra.mxu0 %v104
  %125 = vmatprep.subr.bf16.mxu0 0
  %126 = vmatpush1.bf16.msra.mxu0 %v105
  %127 = vmatprep.subr.bf16.mxu0 0
  %128 = vmatpush1.bf16.msra.mxu0 %v106
  %129 = vmatprep.subr.bf16.mxu0 0
  %130 = vmatpush1.bf16.msra.mxu0 %v107
  %131 = vmatprep.subr.bf16.mxu0 0
  %132 = vmatpush1.bf16.msra.mxu0 %v108
  %133 = vmatprep.subr.bf16.mxu0 0
  %134 = vmatpush1.bf16.msra.mxu0 0
  %135 = vmatprep.subr.bf16.mxu0 0
  %136 = vmatpush1.bf16.msra.mxu0 0
  %137 = vmatprep.subr.bf16.mxu0 0
  %138 = vmatpush1.bf16.msra.mxu0 0
  %139 = vmatprep.subr.bf16.mxu0 0
  %140 = vmatpush1.bf16.msra.mxu0 0
  %141 = vmatprep.subr.bf16.mxu0 0
  %142 = vmatpush1.bf16.msra.mxu0 0
  %143 = vmatprep.subr.bf16.mxu0 0
  %144 = vmatpush1.bf16.msra.mxu0 0
  %145 = vmatprep.subr.bf16.mxu0 0
  %146 = vmatpush1.bf16.msra.mxu0 0
  %147 = vmatprep.subr.bf16.mxu0 0
  %148 = vmatpush1.bf16.msra.mxu0 0
  %149 = vmatprep.mubr.bf16.mxu0 0
  %150 = vmatmul.mubr.bf16.gmra.mrb[0].mxu0 %v63
  %v151 = vpop.f32.mrb[0].mxu0
  %v152 = vadd.f32 0.0, %v151
  %v153 = vpop.f32.mrb[0].mxu0
  %v154 = vpop.f32.mrb[0].mxu0
  %v155 = vadd.f32 0.0, %v154
  %v156 = vpop.f32.mrb[0].mxu0
  %157 = vmatprep.mubr.bf16.mxu0 0
  %158 = vmatmul.mubr.bf16.gmra.mrb[0].mxu0 %v64
  %v159 = vpop.f32.mrb[0].mxu0
  %v160 = vadd.f32 0.0, %v159
  %v161 = vpop.f32.mrb[0].mxu0
  %v162 = vpop.f32.mrb[0].mxu0
  %v163 = vadd.f32 0.0, %v162
  %v164 = vpop.f32.mrb[0].mxu0
  %165 = vmatprep.mubr.bf16.mxu0 0
  %166 = vmatmul.mubr.bf16.gmra.mrb[0].mxu0 %v65
  %v167 = vpop.f32.mrb[0].mxu0
  %v168 = vadd.f32 0.0, %v167
  %v169 = vpop.f32.mrb[0].mxu0
  %v170 = vpop.f32.mrb[0].mxu0
  %v171 = vpop.f32.mrb[0].mxu0
  %172 = vdwg.mxu0
  %v173 = vadd.f32 %v27, %v152
  %v174 = vadd.f32 %v28, %v155
  %v175 = vadd.f32 %v29, %v160
  %v176 = vadd.f32 %v30, %v163
  %v177 = vadd.f32 %v31, %v168
  %178 = vst [vmem:[#allocation2] sm:$0xff] %v173
  %179 = vst [vmem:[#allocation2 + $0x8] sm:$0xff] %v174
  %180 = vst [vmem:[#allocation2 + $0x10] sm:$0xff] %v175
  %181 = vst [vmem:[#allocation2 + $0x18] sm:$0xff] %v176
  %182 = vst [vmem:[#allocation2 + $0x20] sm:$0xff] %v177
  // Predicated region
  $region22: #{mae_linear_probing_forward.15} parent=0 // pred_check
    %p183 = pneg %p18
  $region23: #{mae_linear_probing_forward.15} parent=0 // pred_check_branch
    %185 = sbr.rel (%p183) target = $region25
  $region24: #{mae_linear_probing_forward.15} parent=0 // pred_region
    %v186 = vld [vmem:[#allocation2] sm:$0xff]
    %v187 = vld [vmem:[#allocation2 + $0x8] sm:$0xff]
    %v188 = vld [vmem:[#allocation2 + $0x10] sm:$0xff]
    %v189 = vld [vmem:[#allocation2 + $0x18] sm:$0xff]
    %v190 = vld [vmem:[#allocation2 + $0x20] sm:$0xff]
    %v191 = vld [vmem:[%s2] sm:$0x1]
    %v193 = vlaneseq
    %v194 = vshrl.u32 %v193, 7
    %v195 = vsub.s32 0, %v194
    %v196 = vrot.slane %v191, %v195
    %v198 = vadd.f32 %v186, %v196
    %v199 = vadd.f32 %v187, %v196
    %v200 = vadd.f32 %v188, %v196
    %v201 = vadd.f32 %v189, %v196
    %v202 = vadd.f32 %v190, %v196
    %v203 = vld [vmem:[%s3] sm:$0xf]
    %v204 = vld [vmem:[%s3 + $0x4] sm:$0xf]
    %v205 = vld [vmem:[%s3 + $0x8] sm:$0xf]
    %v206 = vld [vmem:[%s3 + $0xc] sm:$0xf]
    %v207 = vld [vmem:[%s3 + $0x10] sm:$0xf]
    %v208 = vunpack.c.l.bf16 %v203
    %v209 = vunpack.c.l.bf16 %v204
    %v210 = vunpack.c.l.bf16 %v205
    %v211 = vunpack.c.l.bf16 %v206
    %v212 = vunpack.c.l.bf16 %v207
    %v213 = vadd.f32 %v198, %v208
    %v214 = vadd.f32 %v199, %v209
    %v215 = vadd.f32 %v200, %v210
    %v216 = vadd.f32 %v201, %v211
    %v217 = vadd.f32 %v202, %v212
    %v218 = vpack.c.bf16 %v214, %v213
    %v219 = vpack.c.bf16 %v216, %v215
    %v220 = vpack.c.bf16 %v217, %v217
    %v224 = vunpack.c.l.b16 %v218
    %v225 = vunpack.c.h.b16 %v218
    %v226 = vunpack.c.l.b16 %v219
    %v227 = vunpack.c.h.b16 %v219
    %v228 = vunpack.c.l.b16 %v220
    %v229 = vpack.c.b16 %v224, %v224
    %v230 = vpack.c.b16 %v225, %v225
    %v231 = vpack.c.b16 %v226, %v226
    %v232 = vpack.c.b16 %v227, %v227
    %v233 = vpack.c.b16 %v228, %v228
    %239 = vst [vmem:[%s4] sm:$0xf] %v229
    %240 = vst [vmem:[%s4 + $0x4] sm:$0xf] %v230
    %241 = vst [vmem:[%s4 + $0x8] sm:$0xf] %v231
    %242 = vst [vmem:[%s4 + $0xc] sm:$0xf] %v232
    %243 = vst [vmem:[%s4 + $0x10] sm:$0xf] %v233
  $region25: #{mae_linear_probing_forward.15} parent=0 // pred_fallthru
    _
  // Predicated region
  $region26: #{mae_linear_probing_forward.15} parent=0 // pred_check
    _
  $region27: #{mae_linear_probing_forward.15} parent=0 // pred_check_branch
    %245 = sbr.rel (0) target = $region29
  $region28: #{mae_linear_probing_forward.15} parent=0 // pred_region
    _
  $region29: #{mae_linear_probing_forward.15} parent=0 // pred_fallthru
    _
  // Predicated region
  $region30: #{mae_linear_probing_forward.15} parent=0 // pred_check
    _
  $region31: #{mae_linear_probing_forward.15} parent=0 // pred_check_branch
    %247 = sbr.rel (0) target = $region33
  $region32: #{mae_linear_probing_forward.15} parent=0 // pred_region
    _
  $region33: #{mae_linear_probing_forward.15} parent=0 // pred_fallthru
    _

// kernel: mae_linear_probing_forward.16
$region0: #{mae_linear_probing_forward.16}
  #allocation0 [shape = 'u32[]', space=smem, size = 0x4, offset = 0x4, fixed_abs, tag = 'smem constant byte address 0x4 - core index']
  #allocation1 [shape = 'u32[144,128]{1,0:T(1,128)}', space=vmem, size = 0x12000, scoped, tag = 'internal scratch']
  #allocation2 [shape = 'bf16[40,128]{1,0:T(8,128)(2,1)}', space=vmem, size = 0x2800, scoped, tag = 'scratch operand']
  %s0 = inlined_call_operand.vmem [shape: bf16[40,128], index: 0, kind: input, shape index: {}]
  %s1 = inlined_call_operand.vmem [shape: f32[1,128], index: 1, kind: input, shape index: {}]
  %s2 = inlined_call_operand.vmem [shape: f32[1,128], index: 2, kind: input, shape index: {}]
  %s3 = inlined_call_operand.vmem [shape: bf16[128,128], index: 3, kind: input, shape index: {}]
  %s4 = inlined_call_operand.vmem [shape: f32[1,128], index: 4, kind: input, shape index: {}]
  %s5 = inlined_call_operand.vmem [shape: bf16[40,128], index: 5, kind: output, shape index: {}]
  %s6 = sld [smem:[#allocation0]]
  $region34: #{mae_linear_probing_forward.16} parent=0
    _
  %s8 = ssub.s32 1, %s6
  %s9 = scalar_select 0, %s8, %s6
  // Predicated region
  $region2: #{mae_linear_probing_forward.16} parent=0 // pred_check
    _
  $region3: #{mae_linear_probing_forward.16} parent=0 // pred_check_branch
    %11 = sbr.rel (0) target = $region5
  $region4: #{mae_linear_probing_forward.16} parent=0 // pred_region
    _
  $region5: #{mae_linear_probing_forward.16} parent=0 // pred_fallthru
    _
  // Predicated region
  $region6: #{mae_linear_probing_forward.16} parent=0 // pred_check
    _
  $region7: #{mae_linear_probing_forward.16} parent=0 // pred_check_branch
    %13 = sbr.rel (0) target = $region9
  $region8: #{mae_linear_probing_forward.16} parent=0 // pred_region
    _
  $region9: #{mae_linear_probing_forward.16} parent=0 // pred_fallthru
    _
  // Predicated region
  $region10: #{mae_linear_probing_forward.16} parent=0 // pred_check
    _
  $region11: #{mae_linear_probing_forward.16} parent=0 // pred_check_branch
    %15 = sbr.rel (0) target = $region13
  $region12: #{mae_linear_probing_forward.16} parent=0 // pred_region
    _
  $region13: #{mae_linear_probing_forward.16} parent=0 // pred_fallthru
    _
  // Predicated region
  $region14: #{mae_linear_probing_forward.16} parent=0 // pred_check
    _
  $region15: #{mae_linear_probing_forward.16} parent=0 // pred_check_branch
    %17 = sbr.rel (0) target = $region17
  $region16: #{mae_linear_probing_forward.16} parent=0 // pred_region
    _
  $region17: #{mae_linear_probing_forward.16} parent=0 // pred_fallthru
    _
  // Predicated region
  $region18: #{mae_linear_probing_forward.16} parent=0 // pred_check
    _
  $region19: #{mae_linear_probing_forward.16} parent=0 // pred_check_branch
    %19 = sbr.rel (0) target = $region21
  $region20: #{mae_linear_probing_forward.16} parent=0 // pred_region
    _
  $region21: #{mae_linear_probing_forward.16} parent=0 // pred_fallthru
    _
  %p21 = scmp.eq.s32.totalorder 0, 0
  // Predicated region
  $region22: #{mae_linear_probing_forward.16} parent=0 // pred_check
    %p22 = pneg %p21
  $region23: #{mae_linear_probing_forward.16} parent=0 // pred_check_branch
    %24 = sbr.rel (%p22) target = $region25
  $region24: #{mae_linear_probing_forward.16} parent=0 // pred_region
    %v25 = vld [vmem:[%s0] sm:$0xf]
    %v26 = vld [vmem:[%s0 + $0x4] sm:$0xf]
    %v27 = vld [vmem:[%s0 + $0x8] sm:$0xf]
    %v28 = vld [vmem:[%s0 + $0xc] sm:$0xf]
    %v29 = vld [vmem:[%s0 + $0x10] sm:$0xf]
    %v30 = vunpack.c.l.bf16 %v25
    %v31 = vunpack.c.l.bf16 %v26
    %v32 = vunpack.c.l.bf16 %v27
    %v33 = vunpack.c.l.bf16 %v28
    %v34 = vunpack.c.l.bf16 %v29
    %35 = vadd.xlane.f32.xlu0 %v30
    %v36 = vpop.xlane.xlu0 %35
    %37 = vadd.xlane.f32.xlu0 %v31
    %v38 = vpop.xlane.xlu0 %37
    %39 = vadd.xlane.f32.xlu0 %v32
    %v40 = vpop.xlane.xlu0 %39
    %41 = vadd.xlane.f32.xlu0 %v33
    %v42 = vpop.xlane.xlu0 %41
    %43 = vadd.xlane.f32.xlu0 %v34
    %v44 = vpop.xlane.xlu0 %43
    %v45 = vmul.f32 %v36, 0.03125
    %v46 = vmul.f32 %v38, 0.03125
    %v47 = vmul.f32 %v40, 0.03125
    %v48 = vmul.f32 %v42, 0.03125
    %v49 = vmul.f32 %v44, 0.03125
    %v50 = vsub.f32 %v30, %v45
    %v51 = vsub.f32 %v31, %v46
    %v52 = vsub.f32 %v32, %v47
    %v53 = vsub.f32 %v33, %v48
    %v54 = vsub.f32 %v34, %v49
    %v55 = vlaneseq
    %v56 = vand.u32 %v55, 127
    %vm57 = vcmp.lt.s32.totalorder %v56, 32
    %v58 = vsel %vm57, %v50, 0.0
    %v59 = vsel %vm57, %v51, 0.0
    %v60 = vsel %vm57, %v52, 0.0
    %v61 = vsel %vm57, %v53, 0.0
    %v62 = vsel %vm57, %v54, 0.0
    %v63 = vmul.f32 %v58, %v58
    %v64 = vmul.f32 %v59, %v59
    %v65 = vmul.f32 %v60, %v60
    %v66 = vmul.f32 %v61, %v61
    %v67 = vmul.f32 %v62, %v62
    %68 = vadd.xlane.f32.xlu0 %v63
    %v69 = vpop.xlane.xlu0 %68
    %70 = vadd.xlane.f32.xlu0 %v64
    %v71 = vpop.xlane.xlu0 %70
    %72 = vadd.xlane.f32.xlu0 %v65
    %v73 = vpop.xlane.xlu0 %72
    %74 = vadd.xlane.f32.xlu0 %v66
    %v75 = vpop.xlane.xlu0 %74
    %76 = vadd.xlane.f32.xlu0 %v67
    %v77 = vpop.xlane.xlu0 %76
    %v78 = vmul.f32 %v69, 0.03125
    %v79 = vmul.f32 %v71, 0.03125
    %v80 = vmul.f32 %v73, 0.03125
    %v81 = vmul.f32 %v75, 0.03125
    %v82 = vmul.f32 %v77, 0.03125
    %v83 = vadd.f32 %v78, 1e-05
    %v84 = vadd.f32 %v79, 1e-05
    %v85 = vadd.f32 %v80, 1e-05
    %v86 = vadd.f32 %v81, 1e-05
    %v87 = vadd.f32 %v82, 1e-05
    %v88 = vrsqrt.pop %v83
    %v89 = vrsqrt.pop %v84
    %v90 = vrsqrt.pop %v85
    %v91 = vrsqrt.pop %v86
    %v92 = vrsqrt.pop %v87
    %v93 = vmul.f32 %v58, %v88
    %v94 = vmul.f32 %v59, %v89
    %v95 = vmul.f32 %v60, %v90
    %v96 = vmul.f32 %v61, %v91
    %v97 = vmul.f32 %v62, %v92
    %v98 = vld [vmem:[%s1] sm:$0x1]
    %v100 = vlaneseq
    %v101 = vshrl.u32 %v100, 7
    %v102 = vsub.s32 0, %v101
    %v103 = vrot.slane %v98, %v102
    %v105 = vmul.f32 %v93, %v103
    %v106 = vmul.f32 %v94, %v103
    %v107 = vmul.f32 %v95, %v103
    %v108 = vmul.f32 %v96, %v103
    %v109 = vmul.f32 %v97, %v103
    %v110 = vld [vmem:[%s2] sm:$0x1]
    %v112 = vlaneseq
    %v113 = vshrl.u32 %v112, 7
    %v114 = vsub.s32 0, %v113
    %v115 = vrot.slane %v110, %v114
    %v117 = vadd.f32 %v105, %v115
    %v118 = vadd.f32 %v106, %v115
    %v119 = vadd.f32 %v107, %v115
    %v120 = vadd.f32 %v108, %v115
    %v121 = vadd.f32 %v109, %v115
    %v122 = vpack.c.bf16 %v118, %v117
    %v123 = vpack.c.bf16 %v120, %v119
    %v124 = vpack.c.bf16 %v121, %v121
    %v128 = vunpack.c.l.b16 %v122
    %v129 = vunpack.c.h.b16 %v122
    %v130 = vunpack.c.l.b16 %v123
    %v131 = vunpack.c.h.b16 %v123
    %v132 = vunpack.c.l.b16 %v124
    %v133 = vpack.c.b16 %v128, %v128
    %v134 = vpack.c.b16 %v129, %v129
    %v135 = vpack.c.b16 %v130, %v130
    %v136 = vpack.c.b16 %v131, %v131
    %v137 = vpack.c.b16 %v132, %v132
    %143 = vst [vmem:[#allocation2] sm:$0xf] %v133
    %144 = vst [vmem:[#allocation2 + $0x4] sm:$0xf] %v134
    %145 = vst [vmem:[#allocation2 + $0x8] sm:$0xf] %v135
    %146 = vst [vmem:[#allocation2 + $0xc] sm:$0xf] %v136
    %147 = vst [vmem:[#allocation2 + $0x10] sm:$0xf] %v137
  $region25: #{mae_linear_probing_forward.16} parent=0 // pred_fallthru
    _
  %v148 = vld [vmem:[#allocation2] sm:$0xf]
  %v149 = vld [vmem:[#allocation2 + $0x4] sm:$0xf]
  %v150 = vld [vmem:[#allocation2 + $0x8] sm:$0xf]
  %v151 = vld [vmem:[#allocation2 + $0xc] sm:$0xf]
  %v152 = vld [vmem:[#allocation2 + $0x10] sm:$0xf]
  %v153 = vld [vmem:[%s3] sm:$0xf]
  %v154 = vld [vmem:[%s3 + $0x4] sm:$0xf]
  %v155 = vld [vmem:[%s3 + $0x8] sm:$0xf]
  %v156 = vld [vmem:[%s3 + $0xc] sm:$0xf]
  %v157 = vld [vmem:[%s3 + $0x10] sm:$0xf]
  %v158 = vld [vmem:[%s3 + $0x14] sm:$0xf]
  %v159 = vld [vmem:[%s3 + $0x18] sm:$0xf]
  %v160 = vld [vmem:[%s3 + $0x1c] sm:$0xf]
  %v161 = vld [vmem:[%s3 + $0x20] sm:$0xf]
  %v162 = vld [vmem:[%s3 + $0x24] sm:$0xf]
  %v163 = vld [vmem:[%s3 + $0x28] sm:$0xf]
  %v164 = vld [vmem:[%s3 + $0x2c] sm:$0xf]
  %v165 = vld [vmem:[%s3 + $0x30] sm:$0xf]
  %v166 = vld [vmem:[%s3 + $0x34] sm:$0xf]
  %v167 = vld [vmem:[%s3 + $0x38] sm:$0xf]
  %v168 = vld [vmem:[%s3 + $0x3c] sm:$0xf]
  %v169 = vld [vmem:[%s4] sm:$0x1]
  %v171 = vlaneseq
  %v172 = vshrl.u32 %v171, 7
  %v173 = vsub.s32 0, %v172
  %v174 = vrot.slane %v169, %v173
  %v181 = vunpack.c.l.b16 %v148
  %v182 = vunpack.c.l.b16 %v149
  %v183 = vunpack.c.l.b16 %v150
  %v184 = vunpack.c.l.b16 %v151
  %v185 = vunpack.c.l.b16 %v152
  %v186 = vpack.c.b16 %v182, %v181
  %v187 = vpack.c.b16 %v184, %v183
  %v188 = vpack.c.b16 %v185, %v185
  %v208 = vunpack.c.l.b16 %v153
  %v209 = vunpack.c.l.b16 %v154
  %v210 = vunpack.c.l.b16 %v155
  %v211 = vunpack.c.l.b16 %v156
  %v212 = vunpack.c.l.b16 %v157
  %v213 = vunpack.c.l.b16 %v158
  %v214 = vunpack.c.l.b16 %v159
  %v215 = vunpack.c.l.b16 %v160
  %v216 = vunpack.c.l.b16 %v161
  %v217 = vunpack.c.l.b16 %v162
  %v218 = vunpack.c.l.b16 %v163
  %v219 = vunpack.c.l.b16 %v164
  %v220 = vunpack.c.l.b16 %v165
  %v221 = vunpack.c.l.b16 %v166
  %v222 = vunpack.c.l.b16 %v167
  %v223 = vunpack.c.l.b16 %v168
  %v224 = vpack.c.b16 %v209, %v208
  %v225 = vpack.c.b16 %v211, %v210
  %v226 = vpack.c.b16 %v213, %v212
  %v227 = vpack.c.b16 %v215, %v214
  %v228 = vpack.c.b16 %v217, %v216
  %v229 = vpack.c.b16 %v219, %v218
  %v230 = vpack.c.b16 %v221, %v220
  %v231 = vpack.c.b16 %v223, %v222
  %240 = vmatprep.subr.bf16.mxu0 0
  %241 = vmatpush1.bf16.msra.mxu0 %v224
  %242 = vmatprep.subr.bf16.mxu0 0
  %243 = vmatpush1.bf16.msra.mxu0 %v225
  %244 = vmatprep.subr.bf16.mxu0 0
  %245 = vmatpush1.bf16.msra.mxu0 %v226
  %246 = vmatprep.subr.bf16.mxu0 0
  %247 = vmatpush1.bf16.msra.mxu0 %v227
  %248 = vmatprep.subr.bf16.mxu0 0
  %249 = vmatpush1.bf16.msra.mxu0 %v228
  %250 = vmatprep.subr.bf16.mxu0 0
  %251 = vmatpush1.bf16.msra.mxu0 %v229
  %252 = vmatprep.subr.bf16.mxu0 0
  %253 = vmatpush1.bf16.msra.mxu0 %v230
  %254 = vmatprep.subr.bf16.mxu0 0
  %255 = vmatpush1.bf16.msra.mxu0 %v231
  %256 = vmatprep.subr.bf16.mxu0 0
  %257 = vmatpush1.bf16.msra.mxu0 0
  %258 = vmatprep.subr.bf16.mxu0 0
  %259 = vmatpush1.bf16.msra.mxu0 0
  %260 = vmatprep.subr.bf16.mxu0 0
  %261 = vmatpush1.bf16.msra.mxu0 0
  %262 = vmatprep.subr.bf16.mxu0 0
  %263 = vmatpush1.bf16.msra.mxu0 0
  %264 = vmatprep.subr.bf16.mxu0 0
  %265 = vmatpush1.bf16.msra.mxu0 0
  %266 = vmatprep.subr.bf16.mxu0 0
  %267 = vmatpush1.bf16.msra.mxu0 0
  %268 = vmatprep.subr.bf16.mxu0 0
  %269 = vmatpush1.bf16.msra.mxu0 0
  %270 = vmatprep.subr.bf16.mxu0 0
  %271 = vmatpush1.bf16.msra.mxu0 0
  %272 = vmatprep.mubr.bf16.mxu0 0
  %273 = vmatmul.mubr.bf16.gmra.mrb[0].mxu0 %v186
  %v274 = vpop.f32.mrb[0].mxu0
  %v275 = vadd.f32 %v174, %v274
  %v276 = vpop.f32.mrb[0].mxu0
  %v277 = vpop.f32.mrb[0].mxu0
  %v278 = vadd.f32 %v174, %v277
  %v279 = vpop.f32.mrb[0].mxu0
  %280 = vmatprep.mubr.bf16.mxu0 0
  %281 = vmatmul.mubr.bf16.gmra.mrb[0].mxu0 %v187
  %v282 = vpop.f32.mrb[0].mxu0
  %v283 = vadd.f32 %v174, %v282
  %v284 = vpop.f32.mrb[0].mxu0
  %v285 = vpop.f32.mrb[0].mxu0
  %v286 = vadd.f32 %v174, %v285
  %v287 = vpop.f32.mrb[0].mxu0
  %288 = vmatprep.mubr.bf16.mxu0 0
  %289 = vmatmul.mubr.bf16.gmra.mrb[0].mxu0 %v188
  %v290 = vpop.f32.mrb[0].mxu0
  %v291 = vadd.f32 %v174, %v290
  %v292 = vpop.f32.mrb[0].mxu0
  %v293 = vpop.f32.mrb[0].mxu0
  %v294 = vpop.f32.mrb[0].mxu0
  %295 = vdwg.mxu0
  %v296 = vmul.f32 %v275, 0.5
  %v297 = vmul.f32 %v278, 0.5
  %v298 = vmul.f32 %v283, 0.5
  %v299 = vmul.f32 %v286, 0.5
  %v300 = vmul.f32 %v291, 0.5
  %v301 = vmul.f32 %v275, 0.70710677
  %v302 = vmul.f32 %v278, 0.70710677
  %v303 = vmul.f32 %v283, 0.70710677
  %v304 = vmul.f32 %v286, 0.70710677
  %v305 = vmul.f32 %v291, 0.70710677
  %v306 = verf.f32.pop %v301
  %v307 = verf.f32.pop %v302
  %v308 = verf.f32.pop %v303
  %v309 = verf.f32.pop %v304
  %v310 = verf.f32.pop %v305
  %v311 = vadd.f32 %v306, 1.0
  %v312 = vadd.f32 %v307, 1.0
  %v313 = vadd.f32 %v308, 1.0
  %v314 = vadd.f32 %v309, 1.0
  %v315 = vadd.f32 %v310, 1.0
  %v316 = vmul.f32 %v296, %v311
  %v317 = vmul.f32 %v297, %v312
  %v318 = vmul.f32 %v298, %v313
  %v319 = vmul.f32 %v299, %v314
  %v320 = vmul.f32 %v300, %v315
  %v321 = vpack.c.bf16 %v317, %v316
  %v322 = vpack.c.bf16 %v319, %v318
  %v323 = vpack.c.bf16 %v320, %v320
  %v327 = vunpack.c.l.b16 %v321
  %v328 = vunpack.c.h.b16 %v321
  %v329 = vunpack.c.l.b16 %v322
  %v330 = vunpack.c.h.b16 %v322
  %v331 = vunpack.c.l.b16 %v323
  %v332 = vpack.c.b16 %v327, %v327
  %v333 = vpack.c.b16 %v328, %v328
  %v334 = vpack.c.b16 %v329, %v329
  %v335 = vpack.c.b16 %v330, %v330
  %v336 = vpack.c.b16 %v331, %v331
  %342 = vst [vmem:[%s5] sm:$0xf] %v332
  %343 = vst [vmem:[%s5 + $0x4] sm:$0xf] %v333
  %344 = vst [vmem:[%s5 + $0x8] sm:$0xf] %v334
  %345 = vst [vmem:[%s5 + $0xc] sm:$0xf] %v335
  %346 = vst [vmem:[%s5 + $0x10] sm:$0xf] %v336
  // Predicated region
  $region26: #{mae_linear_probing_forward.16} parent=0 // pred_check
    _
  $region27: #{mae_linear_probing_forward.16} parent=0 // pred_check_branch
    %348 = sbr.rel (0) target = $region29
  $region28: #{mae_linear_probing_forward.16} parent=0 // pred_region
    _
  $region29: #{mae_linear_probing_forward.16} parent=0 // pred_fallthru
    _
  // Predicated region
  $region30: #{mae_linear_probing_forward.16} parent=0 // pred_check
    _
  $region31: #{mae_linear_probing_forward.16} parent=0 // pred_check_branch
    %350 = sbr.rel (0) target = $region33
  $region32: #{mae_linear_probing_forward.16} parent=0 // pred_region
    _
  $region33: #{mae_linear_probing_forward.16} parent=0 // pred_fallthru
    _

// kernel: mae_linear_probing_forward.23
$region0: #{mae_linear_probing_forward.23}
  #allocation0 [shape = 'u32[]', space=smem, size = 0x4, offset = 0x4, fixed_abs, tag = 'smem constant byte address 0x4 - core index']
  #allocation1 [shape = 'u32[144,128]{1,0:T(1,128)}', space=vmem, size = 0x12000, scoped, tag = 'internal scratch']
  #allocation2 [shape = 'bf16[8,128]{1,0:T(8,128)(2,1)}', space=vmem, size = 0x800, scoped, tag = 'scratch operand']
  %s0 = inlined_call_operand.vmem [shape: bf16[8,128], index: 0, kind: input, shape index: {}]
  %s1 = inlined_call_operand.vmem [shape: f32[1,128], index: 1, kind: input, shape index: {}]
  %s2 = inlined_call_operand.vmem [shape: f32[1,128], index: 2, kind: input, shape index: {}]
  %s3 = inlined_call_operand.vmem [shape: bf16[128,128], index: 3, kind: input, shape index: {}]
  %s4 = inlined_call_operand.vmem [shape: f32[1,128], index: 4, kind: input, shape index: {}]
  %s5 = inlined_call_operand.vmem [shape: f32[8,128], index: 5, kind: output, shape index: {}]
  %s6 = sld [smem:[#allocation0]]
  $region34: #{mae_linear_probing_forward.23} parent=0
    _
  %s8 = ssub.s32 1, %s6
  %s9 = scalar_select 0, %s8, %s6
  // Predicated region
  $region2: #{mae_linear_probing_forward.23} parent=0 // pred_check
    _
  $region3: #{mae_linear_probing_forward.23} parent=0 // pred_check_branch
    %11 = sbr.rel (0) target = $region5
  $region4: #{mae_linear_probing_forward.23} parent=0 // pred_region
    _
  $region5: #{mae_linear_probing_forward.23} parent=0 // pred_fallthru
    _
  // Predicated region
  $region6: #{mae_linear_probing_forward.23} parent=0 // pred_check
    _
  $region7: #{mae_linear_probing_forward.23} parent=0 // pred_check_branch
    %13 = sbr.rel (0) target = $region9
  $region8: #{mae_linear_probing_forward.23} parent=0 // pred_region
    _
  $region9: #{mae_linear_probing_forward.23} parent=0 // pred_fallthru
    _
  // Predicated region
  $region10: #{mae_linear_probing_forward.23} parent=0 // pred_check
    _
  $region11: #{mae_linear_probing_forward.23} parent=0 // pred_check_branch
    %15 = sbr.rel (0) target = $region13
  $region12: #{mae_linear_probing_forward.23} parent=0 // pred_region
    _
  $region13: #{mae_linear_probing_forward.23} parent=0 // pred_fallthru
    _
  // Predicated region
  $region14: #{mae_linear_probing_forward.23} parent=0 // pred_check
    _
  $region15: #{mae_linear_probing_forward.23} parent=0 // pred_check_branch
    %17 = sbr.rel (0) target = $region17
  $region16: #{mae_linear_probing_forward.23} parent=0 // pred_region
    _
  $region17: #{mae_linear_probing_forward.23} parent=0 // pred_fallthru
    _
  // Predicated region
  $region18: #{mae_linear_probing_forward.23} parent=0 // pred_check
    _
  $region19: #{mae_linear_probing_forward.23} parent=0 // pred_check_branch
    %19 = sbr.rel (0) target = $region21
  $region20: #{mae_linear_probing_forward.23} parent=0 // pred_region
    _
  $region21: #{mae_linear_probing_forward.23} parent=0 // pred_fallthru
    _
  %p21 = scmp.eq.s32.totalorder 0, 0
  // Predicated region
  $region22: #{mae_linear_probing_forward.23} parent=0 // pred_check
    %p22 = pneg %p21
  $region23: #{mae_linear_probing_forward.23} parent=0 // pred_check_branch
    %24 = sbr.rel (%p22) target = $region25
  $region24: #{mae_linear_probing_forward.23} parent=0 // pred_region
    %v25 = vld [vmem:[%s0] sm:$0xf]
    %v26 = vunpack.c.l.bf16 %v25
    %27 = vadd.xlane.f32.xlu0 %v26
    %v28 = vpop.xlane.xlu0 %27
    %v29 = vmul.f32 %v28, 0.03125
    %v30 = vsub.f32 %v26, %v29
    %v31 = vlaneseq
    %v32 = vand.u32 %v31, 127
    %vm33 = vcmp.lt.s32.totalorder %v32, 32
    %v34 = vsel %vm33, %v30, 0.0
    %v35 = vmul.f32 %v34, %v34
    %36 = vadd.xlane.f32.xlu0 %v35
    %v37 = vpop.xlane.xlu0 %36
    %v38 = vmul.f32 %v37, 0.03125
    %v39 = vadd.f32 %v38, 1e-05
    %v40 = vrsqrt.pop %v39
    %v41 = vmul.f32 %v34, %v40
    %v42 = vld [vmem:[%s1] sm:$0x1]
    %v44 = vlaneseq
    %v45 = vshrl.u32 %v44, 7
    %v46 = vsub.s32 0, %v45
    %v47 = vrot.slane %v42, %v46
    %v49 = vmul.f32 %v41, %v47
    %v50 = vld [vmem:[%s2] sm:$0x1]
    %v52 = vlaneseq
    %v53 = vshrl.u32 %v52, 7
    %v54 = vsub.s32 0, %v53
    %v55 = vrot.slane %v50, %v54
    %v57 = vadd.f32 %v49, %v55
    %v58 = vpack.c.bf16 %v57, %v57
    %59 = vst [vmem:[#allocation2] sm:$0xf] %v58
  $region25: #{mae_linear_probing_forward.23} parent=0 // pred_fallthru
    _
  %v60 = vld [vmem:[#allocation2] sm:$0xf]
  %v61 = vld [vmem:[%s3] sm:$0xf]
  %v62 = vld [vmem:[%s3 + $0x4] sm:$0xf]
  %v63 = vld [vmem:[%s3 + $0x8] sm:$0xf]
  %v64 = vld [vmem:[%s3 + $0xc] sm:$0xf]
  %v65 = vld [vmem:[%s3 + $0x10] sm:$0xf]
  %v66 = vld [vmem:[%s3 + $0x14] sm:$0xf]
  %v67 = vld [vmem:[%s3 + $0x18] sm:$0xf]
  %v68 = vld [vmem:[%s3 + $0x1c] sm:$0xf]
  %v69 = vld [vmem:[%s3 + $0x20] sm:$0xf]
  %v70 = vld [vmem:[%s3 + $0x24] sm:$0xf]
  %v71 = vld [vmem:[%s3 + $0x28] sm:$0xf]
  %v72 = vld [vmem:[%s3 + $0x2c] sm:$0xf]
  %v73 = vld [vmem:[%s3 + $0x30] sm:$0xf]
  %v74 = vld [vmem:[%s3 + $0x34] sm:$0xf]
  %v75 = vld [vmem:[%s3 + $0x38] sm:$0xf]
  %v76 = vld [vmem:[%s3 + $0x3c] sm:$0xf]
  %v77 = vld [vmem:[%s4] sm:$0x1]
  %v79 = vlaneseq
  %v80 = vshrl.u32 %v79, 7
  %v81 = vsub.s32 0, %v80
  %v82 = vrot.slane %v77, %v81
  %v100 = vunpack.c.l.b16 %v61
  %v101 = vunpack.c.l.b16 %v62
  %v102 = vunpack.c.l.b16 %v63
  %v103 = vunpack.c.l.b16 %v64
  %v104 = vunpack.c.l.b16 %v65
  %v105 = vunpack.c.l.b16 %v66
  %v106 = vunpack.c.l.b16 %v67
  %v107 = vunpack.c.l.b16 %v68
  %v108 = vunpack.c.l.b16 %v69
  %v109 = vunpack.c.l.b16 %v70
  %v110 = vunpack.c.l.b16 %v71
  %v111 = vunpack.c.l.b16 %v72
  %v112 = vunpack.c.l.b16 %v73
  %v113 = vunpack.c.l.b16 %v74
  %v114 = vunpack.c.l.b16 %v75
  %v115 = vunpack.c.l.b16 %v76
  %v116 = vpack.c.b16 %v101, %v100
  %v117 = vpack.c.b16 %v103, %v102
  %v118 = vpack.c.b16 %v105, %v104
  %v119 = vpack.c.b16 %v107, %v106
  %v120 = vpack.c.b16 %v109, %v108
  %v121 = vpack.c.b16 %v111, %v110
  %v122 = vpack.c.b16 %v113, %v112
  %v123 = vpack.c.b16 %v115, %v114
  %132 = vmatprep.subr.bf16.mxu0 0
  %133 = vmatpush1.bf16.msra.mxu0 %v116
  %134 = vmatprep.subr.bf16.mxu0 0
  %135 = vmatpush1.bf16.msra.mxu0 %v117
  %136 = vmatprep.subr.bf16.mxu0 0
  %137 = vmatpush1.bf16.msra.mxu0 %v118
  %138 = vmatprep.subr.bf16.mxu0 0
  %139 = vmatpush1.bf16.msra.mxu0 %v119
  %140 = vmatprep.subr.bf16.mxu0 0
  %141 = vmatpush1.bf16.msra.mxu0 %v120
  %142 = vmatprep.subr.bf16.mxu0 0
  %143 = vmatpush1.bf16.msra.mxu0 %v121
  %144 = vmatprep.subr.bf16.mxu0 0
  %145 = vmatpush1.bf16.msra.mxu0 %v122
  %146 = vmatprep.subr.bf16.mxu0 0
  %147 = vmatpush1.bf16.msra.mxu0 %v123
  %148 = vmatprep.subr.bf16.mxu0 0
  %149 = vmatpush1.bf16.msra.mxu0 0
  %150 = vmatprep.subr.bf16.mxu0 0
  %151 = vmatpush1.bf16.msra.mxu0 0
  %152 = vmatprep.subr.bf16.mxu0 0
  %153 = vmatpush1.bf16.msra.mxu0 0
  %154 = vmatprep.subr.bf16.mxu0 0
  %155 = vmatpush1.bf16.msra.mxu0 0
  %156 = vmatprep.subr.bf16.mxu0 0
  %157 = vmatpush1.bf16.msra.mxu0 0
  %158 = vmatprep.subr.bf16.mxu0 0
  %159 = vmatpush1.bf16.msra.mxu0 0
  %160 = vmatprep.subr.bf16.mxu0 0
  %161 = vmatpush1.bf16.msra.mxu0 0
  %162 = vmatprep.subr.bf16.mxu0 0
  %163 = vmatpush1.bf16.msra.mxu0 0
  %164 = vmatprep.mubr.bf16.mxu0 0
  %165 = vmatmul.mubr.bf16.gmra.mrb[0].mxu0 %v60
  %v166 = vpop.f32.mrb[0].mxu0
  %v167 = vadd.f32 %v82, %v166
  %v168 = vpop.f32.mrb[0].mxu0
  %v169 = vpop.f32.mrb[0].mxu0
  %v170 = vpop.f32.mrb[0].mxu0
  %171 = vdwg.mxu0
  %172 = vst [vmem:[%s5] sm:$0xff] %v167
  // Predicated region
  $region26: #{mae_linear_probing_forward.23} parent=0 // pred_check
    _
  $region27: #{mae_linear_probing_forward.23} parent=0 // pred_check_branch
    %174 = sbr.rel (0) target = $region29
  $region28: #{mae_linear_probing_forward.23} parent=0 // pred_region
    _
  $region29: #{mae_linear_probing_forward.23} parent=0 // pred_fallthru
    _
  // Predicated region
  $region30: #{mae_linear_probing_forward.23} parent=0 // pred_check
    _
  $region31: #{mae_linear_probing_forward.23} parent=0 // pred_check_branch
    %176 = sbr.rel (0) target = $region33
  $region32: #{mae_linear_probing_forward.23} parent=0 // pred_region
    _
  $region33: #{mae_linear_probing_forward.23} parent=0 // pred_fallthru
    _

</llo_original>
